<compile_context>
chip_gen: v5e
topology: v5e:2x2
jax: 0.10.0
libtpu: 0.0.40
codegen_flags: <defaults>
</compile_context>

<pallas_src>
import jax
import jax.numpy as jnp
from jax.experimental import pallas as pl
from jax.experimental.pallas import tpu as pltpu

# ---- synthetic "bert-tiny"-style config (small shapes, same structure) ----
VOCAB = 100
HIDDEN = 32
NUM_LAYERS = 2
NUM_HEADS = 2
HEAD_DIM = HIDDEN // NUM_HEADS
INTERMEDIATE = 64
MAX_POS = 16
NUM_LABELS = 4
LN_EPS = 1e-12

BATCH = 2
SEQ = 8
BS = BATCH * SEQ


def _round_up(n, m):
    return ((n + m - 1) // m) * m


# ---- packed weight-slab layout (all lane offsets 128-aligned -> no relayouts) ----
_LAYER_STRIDE = (_round_up(3 * HIDDEN, 128) + _round_up(INTERMEDIATE, 128)
                 + _round_up(HIDDEN, 128))                       # 384
OFF_QKV = [l * _LAYER_STRIDE for l in range(NUM_LAYERS)]         # [0, 384]
OFF_W1 = [OFF_QKV[l] + _round_up(3 * HIDDEN, 128) for l in range(NUM_LAYERS)]   # [128, 512]
OFF_WO = [OFF_W1[l] + _round_up(INTERMEDIATE, 128) for l in range(NUM_LAYERS)]  # [256, 640]
OFF_POOL = NUM_LAYERS * _LAYER_STRIDE                            # 768
OFF_OUT = OFF_POOL + _round_up(HIDDEN, 128)                      # 896
W_COLS = OFF_OUT + _round_up(NUM_LABELS, 128)                    # 1024
W2_COLS = NUM_LAYERS * 128                                       # 256

# ---- packed bias / LayerNorm vector slab layout (rows of a (VEC_ROWS, 128) array) ----
VEC_EMB_G, VEC_EMB_B = 0, 1
VEC_LAYER0 = 2
VEC_PER_LAYER = 8        # [bqkv, bo, ln1_g, ln1_b, b1, b2, ln2_g, ln2_b]
VEC_POOL_B = VEC_LAYER0 + NUM_LAYERS * VEC_PER_LAYER             # 18
VEC_OUT_B = VEC_POOL_B + 1                                       # 19
VEC_ROWS = VEC_OUT_B + 1                                         # 20
VEC_COLS = 128


# ----------------------------- fused Pallas kernel -----------------------------
def _fused_bert_kernel(ids_ref,                    # SMEM (B, S) int32 (scalar prefetch)
                       mask_ref,                   # VMEM (1, B*S) int32
                       emb_ref,                    # VMEM (VOCAB+MAX_POS+2, H) f32
                       wh_ref,                     # VMEM (H, W_COLS) bf16
                       w2_ref,                     # VMEM (I, W2_COLS) bf16
                       vec_ref,                    # VMEM (VEC_ROWS, 128) f32
                       o_ref,                      # VMEM (B, NUM_LABELS) f32
                       x_scr):                     # VMEM (B*S, H) f32 scratch
    f32, bf16 = jnp.float32, jnp.bfloat16

    def vrow(r, n):
        return vec_ref[r:r + 1, 0:n]               # (1, n) f32

    def ln(x, g, b):
        mean = jnp.mean(x, axis=-1, keepdims=True)
        var = jnp.mean((x - mean) ** 2, axis=-1, keepdims=True)
        return (x - mean) * jax.lax.rsqrt(var + LN_EPS) * g + b

    def gelu(y):
        # TODO(synk): tanh-approx GELU ("gelu_new"); HF BERT default is erf-based
        # "gelu" (differences < 1e-3 at these magnitudes).
        return 0.5 * y * (1.0 + jnp.tanh(0.7978845608028654 * (y + 0.044715 * y * y * y)))

    # ---- embedding gather + sum (word + position + token-type 0), in-kernel ----
    type_row = emb_ref[VOCAB + MAX_POS:VOCAB + MAX_POS + 1, :]
    for b in range(BATCH):
        for s in range(SEQ):
            r = b * SEQ + s
            tok = ids_ref[b, s]
            x_scr[r:r + 1, :] = (emb_ref[pl.ds(tok, 1), :]
                                 + emb_ref[VOCAB + s:VOCAB + s + 1, :]
                                 + type_row)

    x = ln(x_scr[...], vrow(VEC_EMB_G, HIDDEN), vrow(VEC_EMB_B, HIDDEN))   # (BS, H) f32

    # ---- block-diagonal additive attention mask, built ONCE and reused ----
    row_id = jax.lax.broadcasted_iota(jnp.int32, (BS, BS), 0)
    col_id = jax.lax.broadcasted_iota(jnp.int32, (BS, BS), 1)
    blocks = []
    for b in range(BATCH):
        lo, hi = b * SEQ, (b + 1) * SEQ
        blocks.append(((row_id >= lo) & (row_id < hi))
                      & ((col_id >= lo) & (col_id < hi)))
    same_seq = blocks[0]
    for t in blocks[1:]:
        same_seq = same_seq | t
    key_valid = jnp.broadcast_to(mask_ref[...], (BS, BS)) > 0
    attn_bias = jnp.where(same_seq & key_valid, jnp.float32(0.0), jnp.float32(-1e9))

    for l in range(NUM_LAYERS):                    # static unroll (tiny)
        vb = VEC_LAYER0 + l * VEC_PER_LAYER
        wqkv = wh_ref[:, OFF_QKV[l]:OFF_QKV[l] + 3 * HIDDEN]      # (H, 3H) bf16
        wo = wh_ref[:, OFF_WO[l]:OFF_WO[l] + HIDDEN]              # (H, H)  bf16
        w1 = wh_ref[:, OFF_W1[l]:OFF_W1[l] + INTERMEDIATE]        # (H, I)  bf16
        w2l = w2_ref[:, l * 128:l * 128 + HIDDEN]                 # (I, H)  bf16

        # --- self-attention: fused QKV projection (1/sqrt(dh) folded into Q at init) ---
        qkv = (jnp.dot(x.astype(bf16), wqkv, preferred_element_type=f32)
               + vrow(vb + 0, 3 * HIDDEN))                        # (BS, 3H) f32
        attn = jnp.zeros((BS, HIDDEN), f32)
        for h in range(NUM_HEADS):                 # static unroll over heads
            ho = h * HEAD_DIM
            qh = qkv[:, ho:ho + HEAD_DIM]
            kh = qkv[:, HIDDEN + ho:HIDDEN + ho + HEAD_DIM]
            vh = qkv[:, 2 * HIDDEN + ho:2 * HIDDEN + ho + HEAD_DIM]
            sc = jax.lax.dot_general(qh.astype(bf16), kh.astype(bf16),
                                     (((1,), (1,)), ((), ())),
                                     preferred_element_type=f32) + attn_bias
            s_max = jnp.max(sc, axis=-1, keepdims=True)
            p = jnp.exp(sc - s_max)
            p = p * pl.reciprocal(jnp.sum(p, axis=-1, keepdims=True), approx=True)
            ctx = jnp.dot(p.astype(bf16), vh.astype(bf16), preferred_element_type=f32)
            # per-head output projection summed straight into attn (no concat / relayout)
            attn = attn + jnp.dot(ctx.astype(bf16), wo[ho:ho + HEAD_DIM, :],
                                  preferred_element_type=f32)
        attn = attn + vrow(vb + 1, HIDDEN)
        x = ln(attn + x, vrow(vb + 2, HIDDEN), vrow(vb + 3, HIDDEN))

        # --- feed-forward (GELU / LN kept in f32) ---
        ff = gelu(jnp.dot(x.astype(bf16), w1, preferred_element_type=f32)
                  + vrow(vb + 4, INTERMEDIATE))
        ff = jnp.dot(ff.astype(bf16), w2l, preferred_element_type=f32) + vrow(vb + 5, HIDDEN)
        x = ln(ff + x, vrow(vb + 6, HIDDEN), vrow(vb + 7, HIDDEN))

    # ---- BERT pooler on each sequence's [CLS] + classification head ----
    cls = jnp.concatenate([x[b * SEQ:b * SEQ + 1, :] for b in range(BATCH)], axis=0)  # (B, H)
    pool_w = wh_ref[:, OFF_POOL:OFF_POOL + HIDDEN]
    out_w = wh_ref[:, OFF_OUT:OFF_OUT + NUM_LABELS]
    pooled = jnp.tanh(jnp.dot(cls.astype(bf16), pool_w, preferred_element_type=f32)
                      + vrow(VEC_POOL_B, HIDDEN))
    # self.drop: dropout is the identity in eval/inference mode
    logits = (jnp.dot(pooled.astype(bf16), out_w, preferred_element_type=f32)
              + vrow(VEC_OUT_B, NUM_LABELS))
    o_ref[...] = logits.astype(o_ref.dtype)


# ------------------------------- model wrapper ---------------------------------
def dark_pattern_classifier(params, input_ids, attention_mask):
    b, s = input_ids.shape
    assert b == BATCH and s == SEQ
    mask_flat = attention_mask.reshape(1, b * s).astype(jnp.int32)   # metadata-only reshape

    def full(arr):
        nd = arr.ndim
        return pl.BlockSpec(arr.shape, lambda i, ids, nd=nd: (0,) * nd)

    grid_spec = pltpu.PrefetchScalarGridSpec(
        num_scalar_prefetch=1,                      # input_ids -> SMEM
        grid=(1,),                                  # single step: whole batch as one slab
        in_specs=[full(mask_flat),
                  full(params["emb"]),
                  full(params["w_hidden"]),
                  full(params["w2"]),
                  full(params["vec"])],
        out_specs=pl.BlockSpec((BATCH, NUM_LABELS), lambda i, ids: (0, 0)),
        scratch_shapes=[pltpu.VMEM((BS, HIDDEN), jnp.float32)],
    )
    logits = pl.pallas_call(
        _fused_bert_kernel,
        grid_spec=grid_spec,
        out_shape=jax.ShapeDtypeStruct((BATCH, NUM_LABELS), jnp.float32),
        compiler_params=pltpu.CompilerParams(dimension_semantics=("arbitrary",)),
    )(input_ids.astype(jnp.int32), mask_flat, params["emb"],
      params["w_hidden"], params["w2"], params["vec"])
    return logits


# --------------------------------- params --------------------------------------
def init_params(key):
    keys = iter(jax.random.split(key, 40))

    def rnd(shape):
        return jax.random.normal(next(keys), shape, jnp.float32) * 0.02

    word = rnd((VOCAB, HIDDEN))
    pos = rnd((MAX_POS, HIDDEN))
    typ = rnd((2, HIDDEN))
    emb = jnp.concatenate([word, pos, typ], axis=0)          # (VOCAB+MAX_POS+2, H) f32

    w_slab = jnp.zeros((HIDDEN, W_COLS), jnp.float32)
    w2_slab = jnp.zeros((INTERMEDIATE, W2_COLS), jnp.float32)
    vec = jnp.zeros((VEC_ROWS, VEC_COLS), jnp.float32)

    vec = vec.at[VEC_EMB_G, :HIDDEN].set(1.0)                 # embedding LN gamma

    scale = 1.0 / float(HEAD_DIM) ** 0.5
    for l in range(NUM_LAYERS):
        # fold 1/sqrt(head_dim) into Q weight AND Q bias (one-time transform)
        wq = rnd((HIDDEN, HIDDEN)) * scale
        wk = rnd((HIDDEN, HIDDEN))
        wv = rnd((HIDDEN, HIDDEN))
        wo = rnd((HIDDEN, HIDDEN))
        w1 = rnd((HIDDEN, INTERMEDIATE))
        w2 = rnd((INTERMEDIATE, HIDDEN))
        bqkv = rnd((3 * HIDDEN,))
        bqkv = bqkv.at[:HIDDEN].multiply(scale)

        w_slab = w_slab.at[:, OFF_QKV[l]:OFF_QKV[l] + 3 * HIDDEN].set(
            jnp.concatenate([wq, wk, wv], axis=1))
        w_slab = w_slab.at[:, OFF_W1[l]:OFF_W1[l] + INTERMEDIATE].set(w1)
        w_slab = w_slab.at[:, OFF_WO[l]:OFF_WO[l] + HIDDEN].set(wo)
        w2_slab = w2_slab.at[:, l * 128:l * 128 + HIDDEN].set(w2)

        vb = VEC_LAYER0 + l * VEC_PER_LAYER
        vec = vec.at[vb + 0, :3 * HIDDEN].set(bqkv)
        vec = vec.at[vb + 1, :HIDDEN].set(rnd((HIDDEN,)))             # bo
        vec = vec.at[vb + 2, :HIDDEN].set(1.0)                        # ln1 gamma
        vec = vec.at[vb + 4, :INTERMEDIATE].set(rnd((INTERMEDIATE,))) # b1
        vec = vec.at[vb + 5, :HIDDEN].set(rnd((HIDDEN,)))             # b2
        vec = vec.at[vb + 6, :HIDDEN].set(1.0)                        # ln2 gamma

    w_slab = w_slab.at[:, OFF_POOL:OFF_POOL + HIDDEN].set(rnd((HIDDEN, HIDDEN)))
    w_slab = w_slab.at[:, OFF_OUT:OFF_OUT + NUM_LABELS].set(rnd((HIDDEN, NUM_LABELS)))
    vec = vec.at[VEC_POOL_B, :HIDDEN].set(rnd((HIDDEN,)))
    vec = vec.at[VEC_OUT_B, :NUM_LABELS].set(rnd((NUM_LABELS,)))

    return {"emb": emb,
            "w_hidden": w_slab.astype(jnp.bfloat16),    # MXU-native bf16 weights
            "w2": w2_slab.astype(jnp.bfloat16),
            "vec": vec}                                  # biases / LN params stay f32


if __name__ == "__main__":
    key = jax.random.PRNGKey(0)
    k_param, k_ids = jax.random.split(key)
    params = init_params(k_param)

    input_ids = jax.random.randint(k_ids, (BATCH, SEQ), 0, VOCAB, dtype=jnp.int32)
    # deterministic mask with some padding on the second sequence
    attention_mask = jnp.array(
        [[1, 1, 1, 1, 1, 1, 1, 1],
         [1, 1, 1, 1, 1, 0, 0, 0]], dtype=jnp.int32
    )

    fwd = jax.jit(dark_pattern_classifier)
    logits = fwd(params, input_ids, attention_mask)
    jax.block_until_ready(logits)
    assert logits.shape == (BATCH, NUM_LABELS)
    print("KERNEL_OK")
</pallas_src>

<mosaic_0001>
module attributes {stable_mosaic.version = 11 : i64} {
  func.func @_fused_bert_kernel(%arg0: i32, %arg1: memref<2x8xi32, #tpu.memory_space<smem>>, %arg2: memref<1x16xi32, #tpu.memory_space<vmem>>, %arg3: memref<118x32xf32, #tpu.memory_space<vmem>>, %arg4: memref<32x1024xbf16, #tpu.memory_space<vmem>>, %arg5: memref<64x256xbf16, #tpu.memory_space<vmem>>, %arg6: memref<20x128xf32, #tpu.memory_space<vmem>>, %arg7: memref<2x4xf32, #tpu.memory_space<vmem>>, %arg8: memref<16x32xf32, #tpu.memory_space<vmem>>) attributes {dimension_semantics = [#tpu.dimension_semantics<arbitrary>], iteration_bounds = array<i64: 1>, scalar_prefetch = 1 : i64, scratch_operands = 1 : i64, tpu.core_type = #tpu.core_type<tc>, window_params = [{pipeline_mode = #tpu.pipeline_mode<synchronous>, transform_indices = @transform_0, window_bounds = array<i64: 1, 16>}, {pipeline_mode = #tpu.pipeline_mode<synchronous>, transform_indices = @transform_1, window_bounds = array<i64: 118, 32>}, {pipeline_mode = #tpu.pipeline_mode<synchronous>, transform_indices = @transform_2, window_bounds = array<i64: 32, 1024>}, {pipeline_mode = #tpu.pipeline_mode<synchronous>, transform_indices = @transform_3, window_bounds = array<i64: 64, 256>}, {pipeline_mode = #tpu.pipeline_mode<synchronous>, transform_indices = @transform_4, window_bounds = array<i64: 20, 128>}, {pipeline_mode = #tpu.pipeline_mode<synchronous>, transform_indices = @transform_5, window_bounds = array<i64: 2, 4>}]} {
    %c116 = arith.constant 116 : index
    %c0 = arith.constant 0 : index
    %0 = vector.load %arg3[%c116, %c0] : memref<118x32xf32, #tpu.memory_space<vmem>>, vector<1x32xf32>
    %c0_0 = arith.constant 0 : index
    %c0_1 = arith.constant 0 : index
    %1 = memref.load %arg1[%c0_0, %c0_1] : memref<2x8xi32, #tpu.memory_space<smem>>
    %2 = arith.index_cast %1 : i32 to index
    %c0_2 = arith.constant 0 : index
    %3 = vector.load %arg3[%2, %c0_2] : memref<118x32xf32, #tpu.memory_space<vmem>>, vector<1x32xf32>
    %c100 = arith.constant 100 : index
    %c0_3 = arith.constant 0 : index
    %4 = vector.load %arg3[%c100, %c0_3] : memref<118x32xf32, #tpu.memory_space<vmem>>, vector<1x32xf32>
    %5 = arith.addf %3, %4 : vector<1x32xf32>
    %6 = arith.addf %5, %0 : vector<1x32xf32>
    %c0_4 = arith.constant 0 : index
    %c0_5 = arith.constant 0 : index
    %7 = vector.load %arg8[%c0_4, %c0_5] : memref<16x32xf32, #tpu.memory_space<vmem>>, vector<1x32xf32>
    tpu.vector_store %arg8[%c0_4, %c0_5], %6 {strides = array<i32>} : memref<16x32xf32, #tpu.memory_space<vmem>>, vector<1x32xf32>,
    %c0_6 = arith.constant 0 : index
    %c1 = arith.constant 1 : index
    %8 = memref.load %arg1[%c0_6, %c1] : memref<2x8xi32, #tpu.memory_space<smem>>
    %9 = arith.index_cast %8 : i32 to index
    %c0_7 = arith.constant 0 : index
    %10 = vector.load %arg3[%9, %c0_7] : memref<118x32xf32, #tpu.memory_space<vmem>>, vector<1x32xf32>
    %c101 = arith.constant 101 : index
    %c0_8 = arith.constant 0 : index
    %11 = vector.load %arg3[%c101, %c0_8] : memref<118x32xf32, #tpu.memory_space<vmem>>, vector<1x32xf32>
    %12 = arith.addf %10, %11 : vector<1x32xf32>
    %13 = arith.addf %12, %0 : vector<1x32xf32>
    %c1_9 = arith.constant 1 : index
    %c0_10 = arith.constant 0 : index
    %14 = vector.load %arg8[%c1_9, %c0_10] : memref<16x32xf32, #tpu.memory_space<vmem>>, vector<1x32xf32>
    tpu.vector_store %arg8[%c1_9, %c0_10], %13 {strides = array<i32>} : memref<16x32xf32, #tpu.memory_space<vmem>>, vector<1x32xf32>,
    %c0_11 = arith.constant 0 : index
    %c2 = arith.constant 2 : index
    %15 = memref.load %arg1[%c0_11, %c2] : memref<2x8xi32, #tpu.memory_space<smem>>
    %16 = arith.index_cast %15 : i32 to index
    %c0_12 = arith.constant 0 : index
    %17 = vector.load %arg3[%16, %c0_12] : memref<118x32xf32, #tpu.memory_space<vmem>>, vector<1x32xf32>
    %c102 = arith.constant 102 : index
    %c0_13 = arith.constant 0 : index
    %18 = vector.load %arg3[%c102, %c0_13] : memref<118x32xf32, #tpu.memory_space<vmem>>, vector<1x32xf32>
    %19 = arith.addf %17, %18 : vector<1x32xf32>
    %20 = arith.addf %19, %0 : vector<1x32xf32>
    %c2_14 = arith.constant 2 : index
    %c0_15 = arith.constant 0 : index
    %21 = vector.load %arg8[%c2_14, %c0_15] : memref<16x32xf32, #tpu.memory_space<vmem>>, vector<1x32xf32>
    tpu.vector_store %arg8[%c2_14, %c0_15], %20 {strides = array<i32>} : memref<16x32xf32, #tpu.memory_space<vmem>>, vector<1x32xf32>,
    %c0_16 = arith.constant 0 : index
    %c3 = arith.constant 3 : index
    %22 = memref.load %arg1[%c0_16, %c3] : memref<2x8xi32, #tpu.memory_space<smem>>
    %23 = arith.index_cast %22 : i32 to index
    %c0_17 = arith.constant 0 : index
    %24 = vector.load %arg3[%23, %c0_17] : memref<118x32xf32, #tpu.memory_space<vmem>>, vector<1x32xf32>
    %c103 = arith.constant 103 : index
    %c0_18 = arith.constant 0 : index
    %25 = vector.load %arg3[%c103, %c0_18] : memref<118x32xf32, #tpu.memory_space<vmem>>, vector<1x32xf32>
    %26 = arith.addf %24, %25 : vector<1x32xf32>
    %27 = arith.addf %26, %0 : vector<1x32xf32>
    %c3_19 = arith.constant 3 : index
    %c0_20 = arith.constant 0 : index
    %28 = vector.load %arg8[%c3_19, %c0_20] : memref<16x32xf32, #tpu.memory_space<vmem>>, vector<1x32xf32>
    tpu.vector_store %arg8[%c3_19, %c0_20], %27 {strides = array<i32>} : memref<16x32xf32, #tpu.memory_space<vmem>>, vector<1x32xf32>,
    %c0_21 = arith.constant 0 : index
    %c4 = arith.constant 4 : index
    %29 = memref.load %arg1[%c0_21, %c4] : memref<2x8xi32, #tpu.memory_space<smem>>
    %30 = arith.index_cast %29 : i32 to index
    %c0_22 = arith.constant 0 : index
    %31 = vector.load %arg3[%30, %c0_22] : memref<118x32xf32, #tpu.memory_space<vmem>>, vector<1x32xf32>
    %c104 = arith.constant 104 : index
    %c0_23 = arith.constant 0 : index
    %32 = vector.load %arg3[%c104, %c0_23] : memref<118x32xf32, #tpu.memory_space<vmem>>, vector<1x32xf32>
    %33 = arith.addf %31, %32 : vector<1x32xf32>
    %34 = arith.addf %33, %0 : vector<1x32xf32>
    %c4_24 = arith.constant 4 : index
    %c0_25 = arith.constant 0 : index
    %35 = vector.load %arg8[%c4_24, %c0_25] : memref<16x32xf32, #tpu.memory_space<vmem>>, vector<1x32xf32>
    tpu.vector_store %arg8[%c4_24, %c0_25], %34 {strides = array<i32>} : memref<16x32xf32, #tpu.memory_space<vmem>>, vector<1x32xf32>,
    %c0_26 = arith.constant 0 : index
    %c5 = arith.constant 5 : index
    %36 = memref.load %arg1[%c0_26, %c5] : memref<2x8xi32, #tpu.memory_space<smem>>
    %37 = arith.index_cast %36 : i32 to index
    %c0_27 = arith.constant 0 : index
    %38 = vector.load %arg3[%37, %c0_27] : memref<118x32xf32, #tpu.memory_space<vmem>>, vector<1x32xf32>
    %c105 = arith.constant 105 : index
    %c0_28 = arith.constant 0 : index
    %39 = vector.load %arg3[%c105, %c0_28] : memref<118x32xf32, #tpu.memory_space<vmem>>, vector<1x32xf32>
    %40 = arith.addf %38, %39 : vector<1x32xf32>
    %41 = arith.addf %40, %0 : vector<1x32xf32>
    %c5_29 = arith.constant 5 : index
    %c0_30 = arith.constant 0 : index
    %42 = vector.load %arg8[%c5_29, %c0_30] : memref<16x32xf32, #tpu.memory_space<vmem>>, vector<1x32xf32>
    tpu.vector_store %arg8[%c5_29, %c0_30], %41 {strides = array<i32>} : memref<16x32xf32, #tpu.memory_space<vmem>>, vector<1x32xf32>,
    %c0_31 = arith.constant 0 : index
    %c6 = arith.constant 6 : index
    %43 = memref.load %arg1[%c0_31, %c6] : memref<2x8xi32, #tpu.memory_space<smem>>
    %44 = arith.index_cast %43 : i32 to index
    %c0_32 = arith.constant 0 : index
    %45 = vector.load %arg3[%44, %c0_32] : memref<118x32xf32, #tpu.memory_space<vmem>>, vector<1x32xf32>
    %c106 = arith.constant 106 : index
    %c0_33 = arith.constant 0 : index
    %46 = vector.load %arg3[%c106, %c0_33] : memref<118x32xf32, #tpu.memory_space<vmem>>, vector<1x32xf32>
    %47 = arith.addf %45, %46 : vector<1x32xf32>
    %48 = arith.addf %47, %0 : vector<1x32xf32>
    %c6_34 = arith.constant 6 : index
    %c0_35 = arith.constant 0 : index
    %49 = vector.load %arg8[%c6_34, %c0_35] : memref<16x32xf32, #tpu.memory_space<vmem>>, vector<1x32xf32>
    tpu.vector_store %arg8[%c6_34, %c0_35], %48 {strides = array<i32>} : memref<16x32xf32, #tpu.memory_space<vmem>>, vector<1x32xf32>,
    %c0_36 = arith.constant 0 : index
    %c7 = arith.constant 7 : index
    %50 = memref.load %arg1[%c0_36, %c7] : memref<2x8xi32, #tpu.memory_space<smem>>
    %51 = arith.index_cast %50 : i32 to index
    %c0_37 = arith.constant 0 : index
    %52 = vector.load %arg3[%51, %c0_37] : memref<118x32xf32, #tpu.memory_space<vmem>>, vector<1x32xf32>
    %c107 = arith.constant 107 : index
    %c0_38 = arith.constant 0 : index
    %53 = vector.load %arg3[%c107, %c0_38] : memref<118x32xf32, #tpu.memory_space<vmem>>, vector<1x32xf32>
    %54 = arith.addf %52, %53 : vector<1x32xf32>
    %55 = arith.addf %54, %0 : vector<1x32xf32>
    %c7_39 = arith.constant 7 : index
    %c0_40 = arith.constant 0 : index
    %56 = vector.load %arg8[%c7_39, %c0_40] : memref<16x32xf32, #tpu.memory_space<vmem>>, vector<1x32xf32>
    tpu.vector_store %arg8[%c7_39, %c0_40], %55 {strides = array<i32>} : memref<16x32xf32, #tpu.memory_space<vmem>>, vector<1x32xf32>,
    %c1_41 = arith.constant 1 : index
    %c0_42 = arith.constant 0 : index
    %57 = memref.load %arg1[%c1_41, %c0_42] : memref<2x8xi32, #tpu.memory_space<smem>>
    %58 = arith.index_cast %57 : i32 to index
    %c0_43 = arith.constant 0 : index
    %59 = vector.load %arg3[%58, %c0_43] : memref<118x32xf32, #tpu.memory_space<vmem>>, vector<1x32xf32>
    %c100_44 = arith.constant 100 : index
    %c0_45 = arith.constant 0 : index
    %60 = vector.load %arg3[%c100_44, %c0_45] : memref<118x32xf32, #tpu.memory_space<vmem>>, vector<1x32xf32>
    %61 = arith.addf %59, %60 : vector<1x32xf32>
    %62 = arith.addf %61, %0 : vector<1x32xf32>
    %c8 = arith.constant 8 : index
    %c0_46 = arith.constant 0 : index
    %63 = vector.load %arg8[%c8, %c0_46] : memref<16x32xf32, #tpu.memory_space<vmem>>, vector<1x32xf32>
    tpu.vector_store %arg8[%c8, %c0_46], %62 {strides = array<i32>} : memref<16x32xf32, #tpu.memory_space<vmem>>, vector<1x32xf32>,
    %c1_47 = arith.constant 1 : index
    %c1_48 = arith.constant 1 : index
    %64 = memref.load %arg1[%c1_47, %c1_48] : memref<2x8xi32, #tpu.memory_space<smem>>
    %65 = arith.index_cast %64 : i32 to index
    %c0_49 = arith.constant 0 : index
    %66 = vector.load %arg3[%65, %c0_49] : memref<118x32xf32, #tpu.memory_space<vmem>>, vector<1x32xf32>
    %c101_50 = arith.constant 101 : index
    %c0_51 = arith.constant 0 : index
    %67 = vector.load %arg3[%c101_50, %c0_51] : memref<118x32xf32, #tpu.memory_space<vmem>>, vector<1x32xf32>
    %68 = arith.addf %66, %67 : vector<1x32xf32>
    %69 = arith.addf %68, %0 : vector<1x32xf32>
    %c9 = arith.constant 9 : index
    %c0_52 = arith.constant 0 : index
    %70 = vector.load %arg8[%c9, %c0_52] : memref<16x32xf32, #tpu.memory_space<vmem>>, vector<1x32xf32>
    tpu.vector_store %arg8[%c9, %c0_52], %69 {strides = array<i32>} : memref<16x32xf32, #tpu.memory_space<vmem>>, vector<1x32xf32>,
    %c1_53 = arith.constant 1 : index
    %c2_54 = arith.constant 2 : index
    %71 = memref.load %arg1[%c1_53, %c2_54] : memref<2x8xi32, #tpu.memory_space<smem>>
    %72 = arith.index_cast %71 : i32 to index
    %c0_55 = arith.constant 0 : index
    %73 = vector.load %arg3[%72, %c0_55] : memref<118x32xf32, #tpu.memory_space<vmem>>, vector<1x32xf32>
    %c102_56 = arith.constant 102 : index
    %c0_57 = arith.constant 0 : index
    %74 = vector.load %arg3[%c102_56, %c0_57] : memref<118x32xf32, #tpu.memory_space<vmem>>, vector<1x32xf32>
    %75 = arith.addf %73, %74 : vector<1x32xf32>
    %76 = arith.addf %75, %0 : vector<1x32xf32>
    %c10 = arith.constant 10 : index
    %c0_58 = arith.constant 0 : index
    %77 = vector.load %arg8[%c10, %c0_58] : memref<16x32xf32, #tpu.memory_space<vmem>>, vector<1x32xf32>
    tpu.vector_store %arg8[%c10, %c0_58], %76 {strides = array<i32>} : memref<16x32xf32, #tpu.memory_space<vmem>>, vector<1x32xf32>,
    %c1_59 = arith.constant 1 : index
    %c3_60 = arith.constant 3 : index
    %78 = memref.load %arg1[%c1_59, %c3_60] : memref<2x8xi32, #tpu.memory_space<smem>>
    %79 = arith.index_cast %78 : i32 to index
    %c0_61 = arith.constant 0 : index
    %80 = vector.load %arg3[%79, %c0_61] : memref<118x32xf32, #tpu.memory_space<vmem>>, vector<1x32xf32>
    %c103_62 = arith.constant 103 : index
    %c0_63 = arith.constant 0 : index
    %81 = vector.load %arg3[%c103_62, %c0_63] : memref<118x32xf32, #tpu.memory_space<vmem>>, vector<1x32xf32>
    %82 = arith.addf %80, %81 : vector<1x32xf32>
    %83 = arith.addf %82, %0 : vector<1x32xf32>
    %c11 = arith.constant 11 : index
    %c0_64 = arith.constant 0 : index
    %84 = vector.load %arg8[%c11, %c0_64] : memref<16x32xf32, #tpu.memory_space<vmem>>, vector<1x32xf32>
    tpu.vector_store %arg8[%c11, %c0_64], %83 {strides = array<i32>} : memref<16x32xf32, #tpu.memory_space<vmem>>, vector<1x32xf32>,
    %c1_65 = arith.constant 1 : index
    %c4_66 = arith.constant 4 : index
    %85 = memref.load %arg1[%c1_65, %c4_66] : memref<2x8xi32, #tpu.memory_space<smem>>
    %86 = arith.index_cast %85 : i32 to index
    %c0_67 = arith.constant 0 : index
    %87 = vector.load %arg3[%86, %c0_67] : memref<118x32xf32, #tpu.memory_space<vmem>>, vector<1x32xf32>
    %c104_68 = arith.constant 104 : index
    %c0_69 = arith.constant 0 : index
    %88 = vector.load %arg3[%c104_68, %c0_69] : memref<118x32xf32, #tpu.memory_space<vmem>>, vector<1x32xf32>
    %89 = arith.addf %87, %88 : vector<1x32xf32>
    %90 = arith.addf %89, %0 : vector<1x32xf32>
    %c12 = arith.constant 12 : index
    %c0_70 = arith.constant 0 : index
    %91 = vector.load %arg8[%c12, %c0_70] : memref<16x32xf32, #tpu.memory_space<vmem>>, vector<1x32xf32>
    tpu.vector_store %arg8[%c12, %c0_70], %90 {strides = array<i32>} : memref<16x32xf32, #tpu.memory_space<vmem>>, vector<1x32xf32>,
    %c1_71 = arith.constant 1 : index
    %c5_72 = arith.constant 5 : index
    %92 = memref.load %arg1[%c1_71, %c5_72] : memref<2x8xi32, #tpu.memory_space<smem>>
    %93 = arith.index_cast %92 : i32 to index
    %c0_73 = arith.constant 0 : index
    %94 = vector.load %arg3[%93, %c0_73] : memref<118x32xf32, #tpu.memory_space<vmem>>, vector<1x32xf32>
    %c105_74 = arith.constant 105 : index
    %c0_75 = arith.constant 0 : index
    %95 = vector.load %arg3[%c105_74, %c0_75] : memref<118x32xf32, #tpu.memory_space<vmem>>, vector<1x32xf32>
    %96 = arith.addf %94, %95 : vector<1x32xf32>
    %97 = arith.addf %96, %0 : vector<1x32xf32>
    %c13 = arith.constant 13 : index
    %c0_76 = arith.constant 0 : index
    %98 = vector.load %arg8[%c13, %c0_76] : memref<16x32xf32, #tpu.memory_space<vmem>>, vector<1x32xf32>
    tpu.vector_store %arg8[%c13, %c0_76], %97 {strides = array<i32>} : memref<16x32xf32, #tpu.memory_space<vmem>>, vector<1x32xf32>,
    %c1_77 = arith.constant 1 : index
    %c6_78 = arith.constant 6 : index
    %99 = memref.load %arg1[%c1_77, %c6_78] : memref<2x8xi32, #tpu.memory_space<smem>>
    %100 = arith.index_cast %99 : i32 to index
    %c0_79 = arith.constant 0 : index
    %101 = vector.load %arg3[%100, %c0_79] : memref<118x32xf32, #tpu.memory_space<vmem>>, vector<1x32xf32>
    %c106_80 = arith.constant 106 : index
    %c0_81 = arith.constant 0 : index
    %102 = vector.load %arg3[%c106_80, %c0_81] : memref<118x32xf32, #tpu.memory_space<vmem>>, vector<1x32xf32>
    %103 = arith.addf %101, %102 : vector<1x32xf32>
    %104 = arith.addf %103, %0 : vector<1x32xf32>
    %c14 = arith.constant 14 : index
    %c0_82 = arith.constant 0 : index
    %105 = vector.load %arg8[%c14, %c0_82] : memref<16x32xf32, #tpu.memory_space<vmem>>, vector<1x32xf32>
    tpu.vector_store %arg8[%c14, %c0_82], %104 {strides = array<i32>} : memref<16x32xf32, #tpu.memory_space<vmem>>, vector<1x32xf32>,
    %c1_83 = arith.constant 1 : index
    %c7_84 = arith.constant 7 : index
    %106 = memref.load %arg1[%c1_83, %c7_84] : memref<2x8xi32, #tpu.memory_space<smem>>
    %107 = arith.index_cast %106 : i32 to index
    %c0_85 = arith.constant 0 : index
    %108 = vector.load %arg3[%107, %c0_85] : memref<118x32xf32, #tpu.memory_space<vmem>>, vector<1x32xf32>
    %c107_86 = arith.constant 107 : index
    %c0_87 = arith.constant 0 : index
    %109 = vector.load %arg3[%c107_86, %c0_87] : memref<118x32xf32, #tpu.memory_space<vmem>>, vector<1x32xf32>
    %110 = arith.addf %108, %109 : vector<1x32xf32>
    %111 = arith.addf %110, %0 : vector<1x32xf32>
    %c15 = arith.constant 15 : index
    %c0_88 = arith.constant 0 : index
    %112 = vector.load %arg8[%c15, %c0_88] : memref<16x32xf32, #tpu.memory_space<vmem>>, vector<1x32xf32>
    tpu.vector_store %arg8[%c15, %c0_88], %111 {strides = array<i32>} : memref<16x32xf32, #tpu.memory_space<vmem>>, vector<1x32xf32>,
    %c0_89 = arith.constant 0 : index
    %c0_90 = arith.constant 0 : index
    %113 = vector.load %arg8[%c0_89, %c0_90] : memref<16x32xf32, #tpu.memory_space<vmem>>, vector<16x32xf32>
    %c0_91 = arith.constant 0 : index
    %c0_92 = arith.constant 0 : index
    %114 = vector.load %arg6[%c0_91, %c0_92] : memref<20x128xf32, #tpu.memory_space<vmem>>, vector<1x32xf32>
    %c1_93 = arith.constant 1 : index
    %c0_94 = arith.constant 0 : index
    %115 = vector.load %arg6[%c1_93, %c0_94] : memref<20x128xf32, #tpu.memory_space<vmem>>, vector<1x32xf32>
    %cst = arith.constant dense<0.000000e+00> : vector<16xf32>
    %116 = vector.multi_reduction <add>, %113, %cst [1] : vector<16x32xf32> to vector<16xf32>
    %117 = vector.shape_cast %116 : vector<16xf32> to vector<16x1xf32>
    %cst_95 = arith.constant 3.200000e+01 : f32
    %118 = vector.broadcast %cst_95 : f32 to vector<16x1xf32>
    %119 = arith.divf %117, %118 : vector<16x1xf32>
    %120 = vector.broadcast %119 : vector<16x1xf32> to vector<16x32xf32>
    %121 = arith.subf %113, %120 : vector<16x32xf32>
    %122 = arith.mulf %121, %121 : vector<16x32xf32>
    %cst_96 = arith.constant dense<0.000000e+00> : vector<16xf32>
    %123 = vector.multi_reduction <add>, %122, %cst_96 [1] : vector<16x32xf32> to vector<16xf32>
    %124 = vector.shape_cast %123 : vector<16xf32> to vector<16x1xf32>
    %cst_97 = arith.constant 3.200000e+01 : f32
    %125 = vector.broadcast %cst_97 : f32 to vector<16x1xf32>
    %126 = arith.divf %124, %125 : vector<16x1xf32>
    %127 = vector.broadcast %119 : vector<16x1xf32> to vector<16x32xf32>
    %128 = arith.subf %113, %127 : vector<16x32xf32>
    %cst_98 = arith.constant 9.99999996E-13 : f32
    %129 = vector.broadcast %cst_98 : f32 to vector<16x1xf32>
    %130 = arith.addf %126, %129 : vector<16x1xf32>
    %131 = math.rsqrt %130 : vector<16x1xf32>
    %132 = vector.broadcast %131 : vector<16x1xf32> to vector<16x32xf32>
    %133 = arith.mulf %128, %132 : vector<16x32xf32>
    %134 = vector.broadcast %114 : vector<1x32xf32> to vector<16x32xf32>
    %135 = arith.mulf %133, %134 : vector<16x32xf32>
    %136 = vector.broadcast %115 : vector<1x32xf32> to vector<16x32xf32>
    %137 = arith.addf %135, %136 : vector<16x32xf32>
    %138 = tpu.iota {dimensions = array<i32: 0>} : vector<16x16xi32>
    %139 = tpu.iota {dimensions = array<i32: 1>} : vector<16x16xi32>
    %c0_i32 = arith.constant 0 : i32
    %140 = vector.broadcast %c0_i32 : i32 to vector<16x16xi32>
    %141 = arith.cmpi sge, %138, %140 : vector<16x16xi32>
    %c8_i32 = arith.constant 8 : i32
    %142 = vector.broadcast %c8_i32 : i32 to vector<16x16xi32>
    %143 = arith.cmpi slt, %138, %142 : vector<16x16xi32>
    %144 = arith.andi %141, %143 : vector<16x16xi1>
    %c0_i32_99 = arith.constant 0 : i32
    %145 = vector.broadcast %c0_i32_99 : i32 to vector<16x16xi32>
    %146 = arith.cmpi sge, %139, %145 : vector<16x16xi32>
    %c8_i32_100 = arith.constant 8 : i32
    %147 = vector.broadcast %c8_i32_100 : i32 to vector<16x16xi32>
    %148 = arith.cmpi slt, %139, %147 : vector<16x16xi32>
    %149 = arith.andi %146, %148 : vector<16x16xi1>
    %150 = arith.andi %144, %149 : vector<16x16xi1>
    %c8_i32_101 = arith.constant 8 : i32
    %151 = vector.broadcast %c8_i32_101 : i32 to vector<16x16xi32>
    %152 = arith.cmpi sge, %138, %151 : vector<16x16xi32>
    %c16_i32 = arith.constant 16 : i32
    %153 = vector.broadcast %c16_i32 : i32 to vector<16x16xi32>
    %154 = arith.cmpi slt, %138, %153 : vector<16x16xi32>
    %155 = arith.andi %152, %154 : vector<16x16xi1>
    %c8_i32_102 = arith.constant 8 : i32
    %156 = vector.broadcast %c8_i32_102 : i32 to vector<16x16xi32>
    %157 = arith.cmpi sge, %139, %156 : vector<16x16xi32>
    %c16_i32_103 = arith.constant 16 : i32
    %158 = vector.broadcast %c16_i32_103 : i32 to vector<16x16xi32>
    %159 = arith.cmpi slt, %139, %158 : vector<16x16xi32>
    %160 = arith.andi %157, %159 : vector<16x16xi1>
    %161 = arith.andi %155, %160 : vector<16x16xi1>
    %162 = arith.ori %150, %161 : vector<16x16xi1>
    %c0_104 = arith.constant 0 : index
    %c0_105 = arith.constant 0 : index
    %163 = vector.load %arg2[%c0_104, %c0_105] : memref<1x16xi32, #tpu.memory_space<vmem>>, vector<1x16xi32>
    %164 = vector.shape_cast %163 : vector<1x16xi32> to vector<1x16xi32>
    %165 = vector.broadcast %164 : vector<1x16xi32> to vector<16x16xi32>
    %c0_i32_106 = arith.constant 0 : i32
    %166 = vector.broadcast %c0_i32_106 : i32 to vector<16x16xi32>
    %167 = arith.cmpi sgt, %165, %166 : vector<16x16xi32>
    %168 = arith.andi %162, %167 : vector<16x16xi1>
    %cst_107 = arith.constant 0.000000e+00 : f32
    %cst_108 = arith.constant -1.000000e+09 : f32
    %169 = vector.broadcast %cst_107 : f32 to vector<16x16xf32>
    %170 = vector.broadcast %cst_108 : f32 to vector<16x16xf32>
    %171 = arith.select %168, %169, %170 : vector<16x16xi1>, vector<16x16xf32>
    %c0_109 = arith.constant 0 : index
    %c0_110 = arith.constant 0 : index
    %172 = vector.load %arg4[%c0_109, %c0_110] : memref<32x1024xbf16, #tpu.memory_space<vmem>>, vector<32x96xbf16>
    %c0_111 = arith.constant 0 : index
    %c256 = arith.constant 256 : index
    %173 = vector.load %arg4[%c0_111, %c256] : memref<32x1024xbf16, #tpu.memory_space<vmem>>, vector<32x32xbf16>
    %c0_112 = arith.constant 0 : index
    %c128 = arith.constant 128 : index
    %174 = vector.load %arg4[%c0_112, %c128] : memref<32x1024xbf16, #tpu.memory_space<vmem>>, vector<32x64xbf16>
    %c0_113 = arith.constant 0 : index
    %c0_114 = arith.constant 0 : index
    %175 = vector.load %arg5[%c0_113, %c0_114] : memref<64x256xbf16, #tpu.memory_space<vmem>>, vector<64x32xbf16>
    %176 = arith.truncf %137 : vector<16x32xf32> to vector<16x32xbf16>
    %cst_115 = arith.constant dense<0.000000e+00> : vector<16x96xf32>
    %177 = tpu.matmul %176, %172, %cst_115 {dimension_numbers = #tpu.dot_dimension_numbers<[1], [0], [0], [1], [0, 0, 1, 1], [], []>} : vector<16x32xbf16>, vector<32x96xbf16>, vector<16x96xf32> -> vector<16x96xf32>
    %c2_116 = arith.constant 2 : index
    %c0_117 = arith.constant 0 : index
    %178 = vector.load %arg6[%c2_116, %c0_117] : memref<20x128xf32, #tpu.memory_space<vmem>>, vector<1x96xf32>
    %179 = vector.broadcast %178 : vector<1x96xf32> to vector<16x96xf32>
    %180 = arith.addf %177, %179 : vector<16x96xf32>
    %cst_118 = arith.constant 0.000000e+00 : f32
    %181 = vector.broadcast %cst_118 : f32 to vector<16x32xf32>
    %182 = vector.extract_strided_slice %180 {offsets = [0, 0], sizes = [16, 16], strides = [1, 1]} : vector<16x96xf32> to vector<16x16xf32>
    %183 = vector.extract_strided_slice %180 {offsets = [0, 32], sizes = [16, 16], strides = [1, 1]} : vector<16x96xf32> to vector<16x16xf32>
    %184 = vector.extract_strided_slice %180 {offsets = [0, 64], sizes = [16, 16], strides = [1, 1]} : vector<16x96xf32> to vector<16x16xf32>
    %185 = arith.truncf %182 : vector<16x16xf32> to vector<16x16xbf16>
    %186 = arith.truncf %183 : vector<16x16xf32> to vector<16x16xbf16>
    %cst_119 = arith.constant dense<0.000000e+00> : vector<16x16xf32>
    %187 = tpu.matmul %185, %186, %cst_119 {dimension_numbers = #tpu.dot_dimension_numbers<[1], [1], [0], [0], [0, 0, 1, 0], [], []>} : vector<16x16xbf16>, vector<16x16xbf16>, vector<16x16xf32> -> vector<16x16xf32>
    %188 = arith.addf %187, %171 : vector<16x16xf32>
    %cst_120 = arith.constant dense<0xFF800000> : vector<16xf32>
    %189 = vector.multi_reduction <maximumf>, %188, %cst_120 [1] : vector<16x16xf32> to vector<16xf32>
    %190 = vector.shape_cast %189 : vector<16xf32> to vector<16x1xf32>
    %191 = vector.broadcast %190 : vector<16x1xf32> to vector<16x16xf32>
    %192 = arith.subf %188, %191 : vector<16x16xf32>
    %193 = math.exp %192 : vector<16x16xf32>
    %cst_121 = arith.constant dense<0.000000e+00> : vector<16xf32>
    %194 = vector.multi_reduction <add>, %193, %cst_121 [1] : vector<16x16xf32> to vector<16xf32>
    %195 = vector.shape_cast %194 : vector<16xf32> to vector<16x1xf32>
    %196 = tpu.reciprocal %195 {approx = true} : vector<16x1xf32> -> vector<16x1xf32>
    %197 = vector.broadcast %196 : vector<16x1xf32> to vector<16x16xf32>
    %198 = arith.mulf %193, %197 : vector<16x16xf32>
    %199 = arith.truncf %198 : vector<16x16xf32> to vector<16x16xbf16>
    %200 = arith.truncf %184 : vector<16x16xf32> to vector<16x16xbf16>
    %cst_122 = arith.constant dense<0.000000e+00> : vector<16x16xf32>
    %201 = tpu.matmul %199, %200, %cst_122 {dimension_numbers = #tpu.dot_dimension_numbers<[1], [0], [0], [1], [0, 0, 1, 1], [], []>} : vector<16x16xbf16>, vector<16x16xbf16>, vector<16x16xf32> -> vector<16x16xf32>
    %202 = arith.truncf %201 : vector<16x16xf32> to vector<16x16xbf16>
    %203 = vector.extract_strided_slice %173 {offsets = [0, 0], sizes = [16, 32], strides = [1, 1]} : vector<32x32xbf16> to vector<16x32xbf16>
    %cst_123 = arith.constant dense<0.000000e+00> : vector<16x32xf32>
    %204 = tpu.matmul %202, %203, %cst_123 {dimension_numbers = #tpu.dot_dimension_numbers<[1], [0], [0], [1], [0, 0, 1, 1], [], []>} : vector<16x16xbf16>, vector<16x32xbf16>, vector<16x32xf32> -> vector<16x32xf32>
    %205 = arith.addf %181, %204 : vector<16x32xf32>
    %206 = vector.extract_strided_slice %180 {offsets = [0, 16], sizes = [16, 16], strides = [1, 1]} : vector<16x96xf32> to vector<16x16xf32>
    %207 = vector.extract_strided_slice %180 {offsets = [0, 48], sizes = [16, 16], strides = [1, 1]} : vector<16x96xf32> to vector<16x16xf32>
    %208 = vector.extract_strided_slice %180 {offsets = [0, 80], sizes = [16, 16], strides = [1, 1]} : vector<16x96xf32> to vector<16x16xf32>
    %209 = arith.truncf %206 : vector<16x16xf32> to vector<16x16xbf16>
    %210 = arith.truncf %207 : vector<16x16xf32> to vector<16x16xbf16>
    %cst_124 = arith.constant dense<0.000000e+00> : vector<16x16xf32>
    %211 = tpu.matmul %209, %210, %cst_124 {dimension_numbers = #tpu.dot_dimension_numbers<[1], [1], [0], [0], [0, 0, 1, 0], [], []>} : vector<16x16xbf16>, vector<16x16xbf16>, vector<16x16xf32> -> vector<16x16xf32>
    %212 = arith.addf %211, %171 : vector<16x16xf32>
    %cst_125 = arith.constant dense<0xFF800000> : vector<16xf32>
    %213 = vector.multi_reduction <maximumf>, %212, %cst_125 [1] : vector<16x16xf32> to vector<16xf32>
    %214 = vector.shape_cast %213 : vector<16xf32> to vector<16x1xf32>
    %215 = vector.broadcast %214 : vector<16x1xf32> to vector<16x16xf32>
    %216 = arith.subf %212, %215 : vector<16x16xf32>
    %217 = math.exp %216 : vector<16x16xf32>
    %cst_126 = arith.constant dense<0.000000e+00> : vector<16xf32>
    %218 = vector.multi_reduction <add>, %217, %cst_126 [1] : vector<16x16xf32> to vector<16xf32>
    %219 = vector.shape_cast %218 : vector<16xf32> to vector<16x1xf32>
    %220 = tpu.reciprocal %219 {approx = true} : vector<16x1xf32> -> vector<16x1xf32>
    %221 = vector.broadcast %220 : vector<16x1xf32> to vector<16x16xf32>
    %222 = arith.mulf %217, %221 : vector<16x16xf32>
    %223 = arith.truncf %222 : vector<16x16xf32> to vector<16x16xbf16>
    %224 = arith.truncf %208 : vector<16x16xf32> to vector<16x16xbf16>
    %cst_127 = arith.constant dense<0.000000e+00> : vector<16x16xf32>
    %225 = tpu.matmul %223, %224, %cst_127 {dimension_numbers = #tpu.dot_dimension_numbers<[1], [0], [0], [1], [0, 0, 1, 1], [], []>} : vector<16x16xbf16>, vector<16x16xbf16>, vector<16x16xf32> -> vector<16x16xf32>
    %226 = arith.truncf %225 : vector<16x16xf32> to vector<16x16xbf16>
    %227 = vector.extract_strided_slice %173 {offsets = [16, 0], sizes = [16, 32], strides = [1, 1]} : vector<32x32xbf16> to vector<16x32xbf16>
    %cst_128 = arith.constant dense<0.000000e+00> : vector<16x32xf32>
    %228 = tpu.matmul %226, %227, %cst_128 {dimension_numbers = #tpu.dot_dimension_numbers<[1], [0], [0], [1], [0, 0, 1, 1], [], []>} : vector<16x16xbf16>, vector<16x32xbf16>, vector<16x32xf32> -> vector<16x32xf32>
    %229 = arith.addf %205, %228 : vector<16x32xf32>
    %c3_129 = arith.constant 3 : index
    %c0_130 = arith.constant 0 : index
    %230 = vector.load %arg6[%c3_129, %c0_130] : memref<20x128xf32, #tpu.memory_space<vmem>>, vector<1x32xf32>
    %231 = vector.broadcast %230 : vector<1x32xf32> to vector<16x32xf32>
    %232 = arith.addf %229, %231 : vector<16x32xf32>
    %233 = arith.addf %232, %137 : vector<16x32xf32>
    %c4_131 = arith.constant 4 : index
    %c0_132 = arith.constant 0 : index
    %234 = vector.load %arg6[%c4_131, %c0_132] : memref<20x128xf32, #tpu.memory_space<vmem>>, vector<1x32xf32>
    %c5_133 = arith.constant 5 : index
    %c0_134 = arith.constant 0 : index
    %235 = vector.load %arg6[%c5_133, %c0_134] : memref<20x128xf32, #tpu.memory_space<vmem>>, vector<1x32xf32>
    %cst_135 = arith.constant dense<0.000000e+00> : vector<16xf32>
    %236 = vector.multi_reduction <add>, %233, %cst_135 [1] : vector<16x32xf32> to vector<16xf32>
    %237 = vector.shape_cast %236 : vector<16xf32> to vector<16x1xf32>
    %cst_136 = arith.constant 3.200000e+01 : f32
    %238 = vector.broadcast %cst_136 : f32 to vector<16x1xf32>
    %239 = arith.divf %237, %238 : vector<16x1xf32>
    %240 = vector.broadcast %239 : vector<16x1xf32> to vector<16x32xf32>
    %241 = arith.subf %233, %240 : vector<16x32xf32>
    %242 = arith.mulf %241, %241 : vector<16x32xf32>
    %cst_137 = arith.constant dense<0.000000e+00> : vector<16xf32>
    %243 = vector.multi_reduction <add>, %242, %cst_137 [1] : vector<16x32xf32> to vector<16xf32>
    %244 = vector.shape_cast %243 : vector<16xf32> to vector<16x1xf32>
    %cst_138 = arith.constant 3.200000e+01 : f32
    %245 = vector.broadcast %cst_138 : f32 to vector<16x1xf32>
    %246 = arith.divf %244, %245 : vector<16x1xf32>
    %247 = vector.broadcast %239 : vector<16x1xf32> to vector<16x32xf32>
    %248 = arith.subf %233, %247 : vector<16x32xf32>
    %cst_139 = arith.constant 9.99999996E-13 : f32
    %249 = vector.broadcast %cst_139 : f32 to vector<16x1xf32>
    %250 = arith.addf %246, %249 : vector<16x1xf32>
    %251 = math.rsqrt %250 : vector<16x1xf32>
    %252 = vector.broadcast %251 : vector<16x1xf32> to vector<16x32xf32>
    %253 = arith.mulf %248, %252 : vector<16x32xf32>
    %254 = vector.broadcast %234 : vector<1x32xf32> to vector<16x32xf32>
    %255 = arith.mulf %253, %254 : vector<16x32xf32>
    %256 = vector.broadcast %235 : vector<1x32xf32> to vector<16x32xf32>
    %257 = arith.addf %255, %256 : vector<16x32xf32>
    %258 = arith.truncf %257 : vector<16x32xf32> to vector<16x32xbf16>
    %cst_140 = arith.constant dense<0.000000e+00> : vector<16x64xf32>
    %259 = tpu.matmul %258, %174, %cst_140 {dimension_numbers = #tpu.dot_dimension_numbers<[1], [0], [0], [1], [0, 0, 1, 1], [], []>} : vector<16x32xbf16>, vector<32x64xbf16>, vector<16x64xf32> -> vector<16x64xf32>
    %c6_141 = arith.constant 6 : index
    %c0_142 = arith.constant 0 : index
    %260 = vector.load %arg6[%c6_141, %c0_142] : memref<20x128xf32, #tpu.memory_space<vmem>>, vector<1x64xf32>
    %261 = vector.broadcast %260 : vector<1x64xf32> to vector<16x64xf32>
    %262 = arith.addf %259, %261 : vector<16x64xf32>
    %cst_143 = arith.constant 5.000000e-01 : f32
    %263 = vector.broadcast %cst_143 : f32 to vector<16x64xf32>
    %264 = arith.mulf %263, %262 : vector<16x64xf32>
    %cst_144 = arith.constant 4.471500e-02 : f32
    %265 = vector.broadcast %cst_144 : f32 to vector<16x64xf32>
    %266 = arith.mulf %265, %262 : vector<16x64xf32>
    %267 = arith.mulf %266, %262 : vector<16x64xf32>
    %268 = arith.mulf %267, %262 : vector<16x64xf32>
    %269 = arith.addf %262, %268 : vector<16x64xf32>
    %cst_145 = arith.constant 0.797884583 : f32
    %270 = vector.broadcast %cst_145 : f32 to vector<16x64xf32>
    %271 = arith.mulf %270, %269 : vector<16x64xf32>
    %272 = math.tanh %271 : vector<16x64xf32>
    %cst_146 = arith.constant 1.000000e+00 : f32
    %273 = vector.broadcast %cst_146 : f32 to vector<16x64xf32>
    %274 = arith.addf %273, %272 : vector<16x64xf32>
    %275 = arith.mulf %264, %274 : vector<16x64xf32>
    %276 = arith.truncf %275 : vector<16x64xf32> to vector<16x64xbf16>
    %cst_147 = arith.constant dense<0.000000e+00> : vector<16x32xf32>
    %277 = tpu.matmul %276, %175, %cst_147 {dimension_numbers = #tpu.dot_dimension_numbers<[1], [0], [0], [1], [0, 0, 1, 1], [], []>} : vector<16x64xbf16>, vector<64x32xbf16>, vector<16x32xf32> -> vector<16x32xf32>
    %c7_148 = arith.constant 7 : index
    %c0_149 = arith.constant 0 : index
    %278 = vector.load %arg6[%c7_148, %c0_149] : memref<20x128xf32, #tpu.memory_space<vmem>>, vector<1x32xf32>
    %279 = vector.broadcast %278 : vector<1x32xf32> to vector<16x32xf32>
    %280 = arith.addf %277, %279 : vector<16x32xf32>
    %281 = arith.addf %280, %257 : vector<16x32xf32>
    %c8_150 = arith.constant 8 : index
    %c0_151 = arith.constant 0 : index
    %282 = vector.load %arg6[%c8_150, %c0_151] : memref<20x128xf32, #tpu.memory_space<vmem>>, vector<1x32xf32>
    %c9_152 = arith.constant 9 : index
    %c0_153 = arith.constant 0 : index
    %283 = vector.load %arg6[%c9_152, %c0_153] : memref<20x128xf32, #tpu.memory_space<vmem>>, vector<1x32xf32>
    %cst_154 = arith.constant dense<0.000000e+00> : vector<16xf32>
    %284 = vector.multi_reduction <add>, %281, %cst_154 [1] : vector<16x32xf32> to vector<16xf32>
    %285 = vector.shape_cast %284 : vector<16xf32> to vector<16x1xf32>
    %cst_155 = arith.constant 3.200000e+01 : f32
    %286 = vector.broadcast %cst_155 : f32 to vector<16x1xf32>
    %287 = arith.divf %285, %286 : vector<16x1xf32>
    %288 = vector.broadcast %287 : vector<16x1xf32> to vector<16x32xf32>
    %289 = arith.subf %281, %288 : vector<16x32xf32>
    %290 = arith.mulf %289, %289 : vector<16x32xf32>
    %cst_156 = arith.constant dense<0.000000e+00> : vector<16xf32>
    %291 = vector.multi_reduction <add>, %290, %cst_156 [1] : vector<16x32xf32> to vector<16xf32>
    %292 = vector.shape_cast %291 : vector<16xf32> to vector<16x1xf32>
    %cst_157 = arith.constant 3.200000e+01 : f32
    %293 = vector.broadcast %cst_157 : f32 to vector<16x1xf32>
    %294 = arith.divf %292, %293 : vector<16x1xf32>
    %295 = vector.broadcast %287 : vector<16x1xf32> to vector<16x32xf32>
    %296 = arith.subf %281, %295 : vector<16x32xf32>
    %cst_158 = arith.constant 9.99999996E-13 : f32
    %297 = vector.broadcast %cst_158 : f32 to vector<16x1xf32>
    %298 = arith.addf %294, %297 : vector<16x1xf32>
    %299 = math.rsqrt %298 : vector<16x1xf32>
    %300 = vector.broadcast %299 : vector<16x1xf32> to vector<16x32xf32>
    %301 = arith.mulf %296, %300 : vector<16x32xf32>
    %302 = vector.broadcast %282 : vector<1x32xf32> to vector<16x32xf32>
    %303 = arith.mulf %301, %302 : vector<16x32xf32>
    %304 = vector.broadcast %283 : vector<1x32xf32> to vector<16x32xf32>
    %305 = arith.addf %303, %304 : vector<16x32xf32>
    %c0_159 = arith.constant 0 : index
    %c384 = arith.constant 384 : index
    %306 = vector.load %arg4[%c0_159, %c384] : memref<32x1024xbf16, #tpu.memory_space<vmem>>, vector<32x96xbf16>
    %c0_160 = arith.constant 0 : index
    %c640 = arith.constant 640 : index
    %307 = vector.load %arg4[%c0_160, %c640] : memref<32x1024xbf16, #tpu.memory_space<vmem>>, vector<32x32xbf16>
    %c0_161 = arith.constant 0 : index
    %c512 = arith.constant 512 : index
    %308 = vector.load %arg4[%c0_161, %c512] : memref<32x1024xbf16, #tpu.memory_space<vmem>>, vector<32x64xbf16>
    %c0_162 = arith.constant 0 : index
    %c128_163 = arith.constant 128 : index
    %309 = vector.load %arg5[%c0_162, %c128_163] : memref<64x256xbf16, #tpu.memory_space<vmem>>, vector<64x32xbf16>
    %310 = arith.truncf %305 : vector<16x32xf32> to vector<16x32xbf16>
    %cst_164 = arith.constant dense<0.000000e+00> : vector<16x96xf32>
    %311 = tpu.matmul %310, %306, %cst_164 {dimension_numbers = #tpu.dot_dimension_numbers<[1], [0], [0], [1], [0, 0, 1, 1], [], []>} : vector<16x32xbf16>, vector<32x96xbf16>, vector<16x96xf32> -> vector<16x96xf32>
    %c10_165 = arith.constant 10 : index
    %c0_166 = arith.constant 0 : index
    %312 = vector.load %arg6[%c10_165, %c0_166] : memref<20x128xf32, #tpu.memory_space<vmem>>, vector<1x96xf32>
    %313 = vector.broadcast %312 : vector<1x96xf32> to vector<16x96xf32>
    %314 = arith.addf %311, %313 : vector<16x96xf32>
    %cst_167 = arith.constant 0.000000e+00 : f32
    %315 = vector.broadcast %cst_167 : f32 to vector<16x32xf32>
    %316 = vector.extract_strided_slice %314 {offsets = [0, 0], sizes = [16, 16], strides = [1, 1]} : vector<16x96xf32> to vector<16x16xf32>
    %317 = vector.extract_strided_slice %314 {offsets = [0, 32], sizes = [16, 16], strides = [1, 1]} : vector<16x96xf32> to vector<16x16xf32>
    %318 = vector.extract_strided_slice %314 {offsets = [0, 64], sizes = [16, 16], strides = [1, 1]} : vector<16x96xf32> to vector<16x16xf32>
    %319 = arith.truncf %316 : vector<16x16xf32> to vector<16x16xbf16>
    %320 = arith.truncf %317 : vector<16x16xf32> to vector<16x16xbf16>
    %cst_168 = arith.constant dense<0.000000e+00> : vector<16x16xf32>
    %321 = tpu.matmul %319, %320, %cst_168 {dimension_numbers = #tpu.dot_dimension_numbers<[1], [1], [0], [0], [0, 0, 1, 0], [], []>} : vector<16x16xbf16>, vector<16x16xbf16>, vector<16x16xf32> -> vector<16x16xf32>
    %322 = arith.addf %321, %171 : vector<16x16xf32>
    %cst_169 = arith.constant dense<0xFF800000> : vector<16xf32>
    %323 = vector.multi_reduction <maximumf>, %322, %cst_169 [1] : vector<16x16xf32> to vector<16xf32>
    %324 = vector.shape_cast %323 : vector<16xf32> to vector<16x1xf32>
    %325 = vector.broadcast %324 : vector<16x1xf32> to vector<16x16xf32>
    %326 = arith.subf %322, %325 : vector<16x16xf32>
    %327 = math.exp %326 : vector<16x16xf32>
    %cst_170 = arith.constant dense<0.000000e+00> : vector<16xf32>
    %328 = vector.multi_reduction <add>, %327, %cst_170 [1] : vector<16x16xf32> to vector<16xf32>
    %329 = vector.shape_cast %328 : vector<16xf32> to vector<16x1xf32>
    %330 = tpu.reciprocal %329 {approx = true} : vector<16x1xf32> -> vector<16x1xf32>
    %331 = vector.broadcast %330 : vector<16x1xf32> to vector<16x16xf32>
    %332 = arith.mulf %327, %331 : vector<16x16xf32>
    %333 = arith.truncf %332 : vector<16x16xf32> to vector<16x16xbf16>
    %334 = arith.truncf %318 : vector<16x16xf32> to vector<16x16xbf16>
    %cst_171 = arith.constant dense<0.000000e+00> : vector<16x16xf32>
    %335 = tpu.matmul %333, %334, %cst_171 {dimension_numbers = #tpu.dot_dimension_numbers<[1], [0], [0], [1], [0, 0, 1, 1], [], []>} : vector<16x16xbf16>, vector<16x16xbf16>, vector<16x16xf32> -> vector<16x16xf32>
    %336 = arith.truncf %335 : vector<16x16xf32> to vector<16x16xbf16>
    %337 = vector.extract_strided_slice %307 {offsets = [0, 0], sizes = [16, 32], strides = [1, 1]} : vector<32x32xbf16> to vector<16x32xbf16>
    %cst_172 = arith.constant dense<0.000000e+00> : vector<16x32xf32>
    %338 = tpu.matmul %336, %337, %cst_172 {dimension_numbers = #tpu.dot_dimension_numbers<[1], [0], [0], [1], [0, 0, 1, 1], [], []>} : vector<16x16xbf16>, vector<16x32xbf16>, vector<16x32xf32> -> vector<16x32xf32>
    %339 = arith.addf %315, %338 : vector<16x32xf32>
    %340 = vector.extract_strided_slice %314 {offsets = [0, 16], sizes = [16, 16], strides = [1, 1]} : vector<16x96xf32> to vector<16x16xf32>
    %341 = vector.extract_strided_slice %314 {offsets = [0, 48], sizes = [16, 16], strides = [1, 1]} : vector<16x96xf32> to vector<16x16xf32>
    %342 = vector.extract_strided_slice %314 {offsets = [0, 80], sizes = [16, 16], strides = [1, 1]} : vector<16x96xf32> to vector<16x16xf32>
    %343 = arith.truncf %340 : vector<16x16xf32> to vector<16x16xbf16>
    %344 = arith.truncf %341 : vector<16x16xf32> to vector<16x16xbf16>
    %cst_173 = arith.constant dense<0.000000e+00> : vector<16x16xf32>
    %345 = tpu.matmul %343, %344, %cst_173 {dimension_numbers = #tpu.dot_dimension_numbers<[1], [1], [0], [0], [0, 0, 1, 0], [], []>} : vector<16x16xbf16>, vector<16x16xbf16>, vector<16x16xf32> -> vector<16x16xf32>
    %346 = arith.addf %345, %171 : vector<16x16xf32>
    %cst_174 = arith.constant dense<0xFF800000> : vector<16xf32>
    %347 = vector.multi_reduction <maximumf>, %346, %cst_174 [1] : vector<16x16xf32> to vector<16xf32>
    %348 = vector.shape_cast %347 : vector<16xf32> to vector<16x1xf32>
    %349 = vector.broadcast %348 : vector<16x1xf32> to vector<16x16xf32>
    %350 = arith.subf %346, %349 : vector<16x16xf32>
    %351 = math.exp %350 : vector<16x16xf32>
    %cst_175 = arith.constant dense<0.000000e+00> : vector<16xf32>
    %352 = vector.multi_reduction <add>, %351, %cst_175 [1] : vector<16x16xf32> to vector<16xf32>
    %353 = vector.shape_cast %352 : vector<16xf32> to vector<16x1xf32>
    %354 = tpu.reciprocal %353 {approx = true} : vector<16x1xf32> -> vector<16x1xf32>
    %355 = vector.broadcast %354 : vector<16x1xf32> to vector<16x16xf32>
    %356 = arith.mulf %351, %355 : vector<16x16xf32>
    %357 = arith.truncf %356 : vector<16x16xf32> to vector<16x16xbf16>
    %358 = arith.truncf %342 : vector<16x16xf32> to vector<16x16xbf16>
    %cst_176 = arith.constant dense<0.000000e+00> : vector<16x16xf32>
    %359 = tpu.matmul %357, %358, %cst_176 {dimension_numbers = #tpu.dot_dimension_numbers<[1], [0], [0], [1], [0, 0, 1, 1], [], []>} : vector<16x16xbf16>, vector<16x16xbf16>, vector<16x16xf32> -> vector<16x16xf32>
    %360 = arith.truncf %359 : vector<16x16xf32> to vector<16x16xbf16>
    %361 = vector.extract_strided_slice %307 {offsets = [16, 0], sizes = [16, 32], strides = [1, 1]} : vector<32x32xbf16> to vector<16x32xbf16>
    %cst_177 = arith.constant dense<0.000000e+00> : vector<16x32xf32>
    %362 = tpu.matmul %360, %361, %cst_177 {dimension_numbers = #tpu.dot_dimension_numbers<[1], [0], [0], [1], [0, 0, 1, 1], [], []>} : vector<16x16xbf16>, vector<16x32xbf16>, vector<16x32xf32> -> vector<16x32xf32>
    %363 = arith.addf %339, %362 : vector<16x32xf32>
    %c11_178 = arith.constant 11 : index
    %c0_179 = arith.constant 0 : index
    %364 = vector.load %arg6[%c11_178, %c0_179] : memref<20x128xf32, #tpu.memory_space<vmem>>, vector<1x32xf32>
    %365 = vector.broadcast %364 : vector<1x32xf32> to vector<16x32xf32>
    %366 = arith.addf %363, %365 : vector<16x32xf32>
    %367 = arith.addf %366, %305 : vector<16x32xf32>
    %c12_180 = arith.constant 12 : index
    %c0_181 = arith.constant 0 : index
    %368 = vector.load %arg6[%c12_180, %c0_181] : memref<20x128xf32, #tpu.memory_space<vmem>>, vector<1x32xf32>
    %c13_182 = arith.constant 13 : index
    %c0_183 = arith.constant 0 : index
    %369 = vector.load %arg6[%c13_182, %c0_183] : memref<20x128xf32, #tpu.memory_space<vmem>>, vector<1x32xf32>
    %cst_184 = arith.constant dense<0.000000e+00> : vector<16xf32>
    %370 = vector.multi_reduction <add>, %367, %cst_184 [1] : vector<16x32xf32> to vector<16xf32>
    %371 = vector.shape_cast %370 : vector<16xf32> to vector<16x1xf32>
    %cst_185 = arith.constant 3.200000e+01 : f32
    %372 = vector.broadcast %cst_185 : f32 to vector<16x1xf32>
    %373 = arith.divf %371, %372 : vector<16x1xf32>
    %374 = vector.broadcast %373 : vector<16x1xf32> to vector<16x32xf32>
    %375 = arith.subf %367, %374 : vector<16x32xf32>
    %376 = arith.mulf %375, %375 : vector<16x32xf32>
    %cst_186 = arith.constant dense<0.000000e+00> : vector<16xf32>
    %377 = vector.multi_reduction <add>, %376, %cst_186 [1] : vector<16x32xf32> to vector<16xf32>
    %378 = vector.shape_cast %377 : vector<16xf32> to vector<16x1xf32>
    %cst_187 = arith.constant 3.200000e+01 : f32
    %379 = vector.broadcast %cst_187 : f32 to vector<16x1xf32>
    %380 = arith.divf %378, %379 : vector<16x1xf32>
    %381 = vector.broadcast %373 : vector<16x1xf32> to vector<16x32xf32>
    %382 = arith.subf %367, %381 : vector<16x32xf32>
    %cst_188 = arith.constant 9.99999996E-13 : f32
    %383 = vector.broadcast %cst_188 : f32 to vector<16x1xf32>
    %384 = arith.addf %380, %383 : vector<16x1xf32>
    %385 = math.rsqrt %384 : vector<16x1xf32>
    %386 = vector.broadcast %385 : vector<16x1xf32> to vector<16x32xf32>
    %387 = arith.mulf %382, %386 : vector<16x32xf32>
    %388 = vector.broadcast %368 : vector<1x32xf32> to vector<16x32xf32>
    %389 = arith.mulf %387, %388 : vector<16x32xf32>
    %390 = vector.broadcast %369 : vector<1x32xf32> to vector<16x32xf32>
    %391 = arith.addf %389, %390 : vector<16x32xf32>
    %392 = arith.truncf %391 : vector<16x32xf32> to vector<16x32xbf16>
    %cst_189 = arith.constant dense<0.000000e+00> : vector<16x64xf32>
    %393 = tpu.matmul %392, %308, %cst_189 {dimension_numbers = #tpu.dot_dimension_numbers<[1], [0], [0], [1], [0, 0, 1, 1], [], []>} : vector<16x32xbf16>, vector<32x64xbf16>, vector<16x64xf32> -> vector<16x64xf32>
    %c14_190 = arith.constant 14 : index
    %c0_191 = arith.constant 0 : index
    %394 = vector.load %arg6[%c14_190, %c0_191] : memref<20x128xf32, #tpu.memory_space<vmem>>, vector<1x64xf32>
    %395 = vector.broadcast %394 : vector<1x64xf32> to vector<16x64xf32>
    %396 = arith.addf %393, %395 : vector<16x64xf32>
    %cst_192 = arith.constant 5.000000e-01 : f32
    %397 = vector.broadcast %cst_192 : f32 to vector<16x64xf32>
    %398 = arith.mulf %397, %396 : vector<16x64xf32>
    %cst_193 = arith.constant 4.471500e-02 : f32
    %399 = vector.broadcast %cst_193 : f32 to vector<16x64xf32>
    %400 = arith.mulf %399, %396 : vector<16x64xf32>
    %401 = arith.mulf %400, %396 : vector<16x64xf32>
    %402 = arith.mulf %401, %396 : vector<16x64xf32>
    %403 = arith.addf %396, %402 : vector<16x64xf32>
    %cst_194 = arith.constant 0.797884583 : f32
    %404 = vector.broadcast %cst_194 : f32 to vector<16x64xf32>
    %405 = arith.mulf %404, %403 : vector<16x64xf32>
    %406 = math.tanh %405 : vector<16x64xf32>
    %cst_195 = arith.constant 1.000000e+00 : f32
    %407 = vector.broadcast %cst_195 : f32 to vector<16x64xf32>
    %408 = arith.addf %407, %406 : vector<16x64xf32>
    %409 = arith.mulf %398, %408 : vector<16x64xf32>
    %410 = arith.truncf %409 : vector<16x64xf32> to vector<16x64xbf16>
    %cst_196 = arith.constant dense<0.000000e+00> : vector<16x32xf32>
    %411 = tpu.matmul %410, %309, %cst_196 {dimension_numbers = #tpu.dot_dimension_numbers<[1], [0], [0], [1], [0, 0, 1, 1], [], []>} : vector<16x64xbf16>, vector<64x32xbf16>, vector<16x32xf32> -> vector<16x32xf32>
    %c15_197 = arith.constant 15 : index
    %c0_198 = arith.constant 0 : index
    %412 = vector.load %arg6[%c15_197, %c0_198] : memref<20x128xf32, #tpu.memory_space<vmem>>, vector<1x32xf32>
    %413 = vector.broadcast %412 : vector<1x32xf32> to vector<16x32xf32>
    %414 = arith.addf %411, %413 : vector<16x32xf32>
    %415 = arith.addf %414, %391 : vector<16x32xf32>
    %c16 = arith.constant 16 : index
    %c0_199 = arith.constant 0 : index
    %416 = vector.load %arg6[%c16, %c0_199] : memref<20x128xf32, #tpu.memory_space<vmem>>, vector<1x32xf32>
    %c17 = arith.constant 17 : index
    %c0_200 = arith.constant 0 : index
    %417 = vector.load %arg6[%c17, %c0_200] : memref<20x128xf32, #tpu.memory_space<vmem>>, vector<1x32xf32>
    %cst_201 = arith.constant dense<0.000000e+00> : vector<16xf32>
    %418 = vector.multi_reduction <add>, %415, %cst_201 [1] : vector<16x32xf32> to vector<16xf32>
    %419 = vector.shape_cast %418 : vector<16xf32> to vector<16x1xf32>
    %cst_202 = arith.constant 3.200000e+01 : f32
    %420 = vector.broadcast %cst_202 : f32 to vector<16x1xf32>
    %421 = arith.divf %419, %420 : vector<16x1xf32>
    %422 = vector.broadcast %421 : vector<16x1xf32> to vector<16x32xf32>
    %423 = arith.subf %415, %422 : vector<16x32xf32>
    %424 = arith.mulf %423, %423 : vector<16x32xf32>
    %cst_203 = arith.constant dense<0.000000e+00> : vector<16xf32>
    %425 = vector.multi_reduction <add>, %424, %cst_203 [1] : vector<16x32xf32> to vector<16xf32>
    %426 = vector.shape_cast %425 : vector<16xf32> to vector<16x1xf32>
    %cst_204 = arith.constant 3.200000e+01 : f32
    %427 = vector.broadcast %cst_204 : f32 to vector<16x1xf32>
    %428 = arith.divf %426, %427 : vector<16x1xf32>
    %429 = vector.broadcast %421 : vector<16x1xf32> to vector<16x32xf32>
    %430 = arith.subf %415, %429 : vector<16x32xf32>
    %cst_205 = arith.constant 9.99999996E-13 : f32
    %431 = vector.broadcast %cst_205 : f32 to vector<16x1xf32>
    %432 = arith.addf %428, %431 : vector<16x1xf32>
    %433 = math.rsqrt %432 : vector<16x1xf32>
    %434 = vector.broadcast %433 : vector<16x1xf32> to vector<16x32xf32>
    %435 = arith.mulf %430, %434 : vector<16x32xf32>
    %436 = vector.broadcast %416 : vector<1x32xf32> to vector<16x32xf32>
    %437 = arith.mulf %435, %436 : vector<16x32xf32>
    %438 = vector.broadcast %417 : vector<1x32xf32> to vector<16x32xf32>
    %439 = arith.addf %437, %438 : vector<16x32xf32>
    %440 = vector.extract_strided_slice %439 {offsets = [0, 0], sizes = [1, 32], strides = [1, 1]} : vector<16x32xf32> to vector<1x32xf32>
    %441 = vector.extract_strided_slice %439 {offsets = [8, 0], sizes = [1, 32], strides = [1, 1]} : vector<16x32xf32> to vector<1x32xf32>
    %442 = tpu.concatenate %440, %441 in 0 : vector<1x32xf32>, vector<1x32xf32> -> vector<2x32xf32>
    %c0_206 = arith.constant 0 : index
    %c768 = arith.constant 768 : index
    %443 = vector.load %arg4[%c0_206, %c768] : memref<32x1024xbf16, #tpu.memory_space<vmem>>, vector<32x32xbf16>
    %c0_207 = arith.constant 0 : index
    %c896 = arith.constant 896 : index
    %444 = vector.load %arg4[%c0_207, %c896] : memref<32x1024xbf16, #tpu.memory_space<vmem>>, vector<32x4xbf16>
    %445 = arith.truncf %442 : vector<2x32xf32> to vector<2x32xbf16>
    %cst_208 = arith.constant dense<0.000000e+00> : vector<2x32xf32>
    %446 = tpu.matmul %445, %443, %cst_208 {dimension_numbers = #tpu.dot_dimension_numbers<[1], [0], [0], [1], [0, 0, 1, 1], [], []>} : vector<2x32xbf16>, vector<32x32xbf16>, vector<2x32xf32> -> vector<2x32xf32>
    %c18 = arith.constant 18 : index
    %c0_209 = arith.constant 0 : index
    %447 = vector.load %arg6[%c18, %c0_209] : memref<20x128xf32, #tpu.memory_space<vmem>>, vector<1x32xf32>
    %448 = vector.broadcast %447 : vector<1x32xf32> to vector<2x32xf32>
    %449 = arith.addf %446, %448 : vector<2x32xf32>
    %450 = math.tanh %449 : vector<2x32xf32>
    %451 = arith.truncf %450 : vector<2x32xf32> to vector<2x32xbf16>
    %cst_210 = arith.constant dense<0.000000e+00> : vector<2x4xf32>
    %452 = tpu.matmul %451, %444, %cst_210 {dimension_numbers = #tpu.dot_dimension_numbers<[1], [0], [0], [1], [0, 0, 1, 1], [], []>} : vector<2x32xbf16>, vector<32x4xbf16>, vector<2x4xf32> -> vector<2x4xf32>
    %c19 = arith.constant 19 : index
    %c0_211 = arith.constant 0 : index
    %453 = vector.load %arg6[%c19, %c0_211] : memref<20x128xf32, #tpu.memory_space<vmem>>, vector<1x4xf32>
    %454 = vector.broadcast %453 : vector<1x4xf32> to vector<2x4xf32>
    %455 = arith.addf %452, %454 : vector<2x4xf32>
    %c0_212 = arith.constant 0 : index
    %c0_213 = arith.constant 0 : index
    %456 = vector.load %arg7[%c0_212, %c0_213] : memref<2x4xf32, #tpu.memory_space<vmem>>, vector<2x4xf32>
    tpu.vector_store %arg7[%c0_212, %c0_213], %455 {strides = array<i32>} : memref<2x4xf32, #tpu.memory_space<vmem>>, vector<2x4xf32>,
    return
  }
  func.func @transform_0(%arg0: i32, %arg1: memref<2x8xi32, #tpu.memory_space<smem>>) -> (i32, i32) {
    %c0_i32 = arith.constant 0 : i32
    %c0_i32_0 = arith.constant 0 : i32
    %c0_i32_1 = arith.constant 0 : i32
    return %c0_i32, %c0_i32_0 : i32, i32
  }
  func.func @transform_1(%arg0: i32, %arg1: memref<2x8xi32, #tpu.memory_space<smem>>) -> (i32, i32) {
    %c0_i32 = arith.constant 0 : i32
    %c0_i32_0 = arith.constant 0 : i32
    %c0_i32_1 = arith.constant 0 : i32
    return %c0_i32, %c0_i32_0 : i32, i32
  }
  func.func @transform_2(%arg0: i32, %arg1: memref<2x8xi32, #tpu.memory_space<smem>>) -> (i32, i32) {
    %c0_i32 = arith.constant 0 : i32
    %c0_i32_0 = arith.constant 0 : i32
    %c0_i32_1 = arith.constant 0 : i32
    return %c0_i32, %c0_i32_0 : i32, i32
  }
  func.func @transform_3(%arg0: i32, %arg1: memref<2x8xi32, #tpu.memory_space<smem>>) -> (i32, i32) {
    %c0_i32 = arith.constant 0 : i32
    %c0_i32_0 = arith.constant 0 : i32
    %c0_i32_1 = arith.constant 0 : i32
    return %c0_i32, %c0_i32_0 : i32, i32
  }
  func.func @transform_4(%arg0: i32, %arg1: memref<2x8xi32, #tpu.memory_space<smem>>) -> (i32, i32) {
    %c0_i32 = arith.constant 0 : i32
    %c0_i32_0 = arith.constant 0 : i32
    %c0_i32_1 = arith.constant 0 : i32
    return %c0_i32, %c0_i32_0 : i32, i32
  }
  func.func @transform_5(%arg0: i32, %arg1: memref<2x8xi32, #tpu.memory_space<smem>>) -> (i32, i32) {
    %c0_i32 = arith.constant 0 : i32
    %c0_i32_0 = arith.constant 0 : i32
    %c0_i32_1 = arith.constant 0 : i32
    return %c0_i32, %c0_i32_0 : i32, i32
  }
}

</mosaic_0001>

<llo_original>
// kernel: dark_pattern_classifier.1
$region0: #{dark_pattern_classifier.1}
  #allocation0 [shape = 'u32[]', space=smem, size = 0x4, offset = 0x4, fixed_abs, tag = 'smem constant byte address 0x4 - core index']
  #allocation1 [shape = 'u32[72,128]{1,0:T(1,128)}', space=vmem, size = 0x9000, scoped, tag = 'internal scratch']
  #allocation2 [shape = 'f32[16,32]{1,0:T(8,128)}', space=vmem, size = 0x2000, scoped, tag = 'scratch operand']
  #allocation3 [shape = 's32[1]{0}', space=sflag, size = 0x4, scoped, tag = 'scoped memory for dark_pattern_classifier.1']
  #allocation4 [shape = 'u8[1024]{0}', space=smem, size = 0x400, scoped, tag = 'prefetched SMEM operand 0']
  %s0 = inlined_call_operand.vmem [shape: s32[2,8], index: 0, kind: input, shape index: {}]
  %s1 = inlined_call_operand.vmem [shape: s32[1,16], index: 1, kind: input, shape index: {}]
  %s2 = inlined_call_operand.vmem [shape: f32[118,32], index: 2, kind: input, shape index: {}]
  %s3 = inlined_call_operand.vmem [shape: bf16[32,1024], index: 3, kind: input, shape index: {}]
  %s4 = inlined_call_operand.hbm [shape: bf16[64,256], index: 4, kind: input, shape index: {}]
  %s5 = inlined_call_operand.vmem [shape: f32[20,128], index: 5, kind: input, shape index: {}]
  %s6 = inlined_call_operand.hbm [shape: f32[2,4], index: 6, kind: output, shape index: {}]
  %s7 = sld [smem:[#allocation0]]
  $region34: #{dark_pattern_classifier.1} parent=0
    _
  %s9 = ssub.s32 1, %s7
  %s10 = scalar_select 0, %s9, %s7
  %s12 = sshll.u32 %s0, 4
  %s13 = int_to_ptr.vmem [resolvable:$true] %s12
  %15 = dma.vmem_to_smem %s13, 32, [#allocation4], [#allocation3]
  %17 = dma.done [#allocation3], 32
  %18 = sfence
  $region1: #{dark_pattern_classifier.1} parent=0
    #allocation5 [shape = 'u8[32768]{0}', space=vmem, size = 0x8000, scoped, tag = 'input window, operand 4, single buffered']
    #allocation6 [shape = 's32[1]{0}', space=sflag, size = 0x4, scoped, tag = 'scoped memory for dark_pattern_classifier.1']
    #allocation7 [shape = 's32[1]{0}', space=sflag, size = 0x4, scoped, tag = 'scoped memory for dark_pattern_classifier.1']
    #allocation8 [shape = 'u8[1024]{0}', space=vmem, size = 0x400, scoped, tag = 'output window, operand 0, single buffered']
    %19 = vsyncpa [#allocation6], 0
    %20 = vsyncpa [#allocation7], 0
    // Predicated region
    $region2: #{dark_pattern_classifier.1} parent=1 // pred_check
      _
    $region3: #{dark_pattern_classifier.1} parent=1 // pred_check_branch
      %22 = sbr.rel (0) target = $region5
    $region4: #{dark_pattern_classifier.1} parent=1 // pred_region
      _
    $region5: #{dark_pattern_classifier.1} parent=1 // pred_fallthru
      _
    // Predicated region
    $region6: #{dark_pattern_classifier.1} parent=1 // pred_check
      _
    $region7: #{dark_pattern_classifier.1} parent=1 // pred_check_branch
      %24 = sbr.rel (0) target = $region9
    $region8: #{dark_pattern_classifier.1} parent=1 // pred_region
      _
    $region9: #{dark_pattern_classifier.1} parent=1 // pred_fallthru
      _
    // Predicated region
    $region10: #{dark_pattern_classifier.1} parent=1 // pred_check
      _
    $region11: #{dark_pattern_classifier.1} parent=1 // pred_check_branch
      %26 = sbr.rel (0) target = $region13
    $region12: #{dark_pattern_classifier.1} parent=1 // pred_region
      _
    $region13: #{dark_pattern_classifier.1} parent=1 // pred_fallthru
      _
    // Predicated region
    $region14: #{dark_pattern_classifier.1} parent=1 // pred_check
      _
    $region15: #{dark_pattern_classifier.1} parent=1 // pred_check_branch
      %28 = sbr.rel (0) target = $region17
    $region16: #{dark_pattern_classifier.1} parent=1 // pred_region
      %30 = vsyncadd [#allocation6], 0
      %s31 = sshll.u32 %s4, 4
      %s32 = int_to_ptr.hbm [resolvable:$true] %s31
      %s33 = sshll.u32 [#allocation5], 4
      %s34 = int_to_ptr.vmem [resolvable:$true] %s33
      %39 = dma.hbm_to_vmem [thread:$0]  %s32, 1024, %s34, [#allocation6], 128, 128, 8
    $region17: #{dark_pattern_classifier.1} parent=1 // pred_fallthru
      _
    // Predicated region
    $region18: #{dark_pattern_classifier.1} parent=1 // pred_check
      _
    $region19: #{dark_pattern_classifier.1} parent=1 // pred_check_branch
      %41 = sbr.rel (0) target = $region21
    $region20: #{dark_pattern_classifier.1} parent=1 // pred_region
      _
    $region21: #{dark_pattern_classifier.1} parent=1 // pred_fallthru
      _
    // Predicated region
    $region22: #{dark_pattern_classifier.1} parent=1 // pred_check
      _
    $region23: #{dark_pattern_classifier.1} parent=1 // pred_check_branch
      %43 = sbr.rel (0) target = $region25
    $region24: #{dark_pattern_classifier.1} parent=1 // pred_region
      %45 = dma.done [#allocation6], 1024
    $region25: #{dark_pattern_classifier.1} parent=1 // pred_fallthru
      _
    %v47 = vld [vmem:[%s2 + $0x74] sm:$0x1]
    %s48 = sld [smem:[#allocation4]]
    %s49 = scalar_lea.vmem %s2, %s48
    %v50 = vld [vmem:[%s49] sm:$0x1]
    %v51 = vld [vmem:[%s2 + $0x64] sm:$0x1]
    %v52 = vadd.f32 %v50, %v51
    %v53 = vadd.f32 %v52, %v47
    %vm54 = vcmask 253952
    %55 = vst.msk [vmem:[#allocation2] sm:$0x1] %vm54, %v53
    %s56 = sld [smem:[#allocation4 + $0x1]]
    %s57 = scalar_lea.vmem %s2, %s56
    %v58 = vld [vmem:[%s57] sm:$0x1]
    %v59 = vld [vmem:[%s2 + $0x65] sm:$0x1]
    %v60 = vadd.f32 %v58, %v59
    %v61 = vadd.f32 %v60, %v47
    %62 = vst.msk [vmem:[#allocation2 + $0x1] sm:$0x1] %vm54, %v61
    %s63 = sld [smem:[#allocation4 + $0x2]]
    %s64 = scalar_lea.vmem %s2, %s63
    %v65 = vld [vmem:[%s64] sm:$0x1]
    %v66 = vld [vmem:[%s2 + $0x66] sm:$0x1]
    %v67 = vadd.f32 %v65, %v66
    %v68 = vadd.f32 %v67, %v47
    %69 = vst.msk [vmem:[#allocation2 + $0x2] sm:$0x1] %vm54, %v68
    %s70 = sld [smem:[#allocation4 + $0x3]]
    %s71 = scalar_lea.vmem %s2, %s70
    %v72 = vld [vmem:[%s71] sm:$0x1]
    %v73 = vld [vmem:[%s2 + $0x67] sm:$0x1]
    %v74 = vadd.f32 %v72, %v73
    %v75 = vadd.f32 %v74, %v47
    %76 = vst.msk [vmem:[#allocation2 + $0x3] sm:$0x1] %vm54, %v75
    %s77 = sld [smem:[#allocation4 + $0x4]]
    %s78 = scalar_lea.vmem %s2, %s77
    %v79 = vld [vmem:[%s78] sm:$0x1]
    %v80 = vld [vmem:[%s2 + $0x68] sm:$0x1]
    %v81 = vadd.f32 %v79, %v80
    %v82 = vadd.f32 %v81, %v47
    %83 = vst.msk [vmem:[#allocation2 + $0x4] sm:$0x1] %vm54, %v82
    %s84 = sld [smem:[#allocation4 + $0x5]]
    %s85 = scalar_lea.vmem %s2, %s84
    %v86 = vld [vmem:[%s85] sm:$0x1]
    %v87 = vld [vmem:[%s2 + $0x69] sm:$0x1]
    %v88 = vadd.f32 %v86, %v87
    %v89 = vadd.f32 %v88, %v47
    %90 = vst.msk [vmem:[#allocation2 + $0x5] sm:$0x1] %vm54, %v89
    %s91 = sld [smem:[#allocation4 + $0x6]]
    %s92 = scalar_lea.vmem %s2, %s91
    %v93 = vld [vmem:[%s92] sm:$0x1]
    %v94 = vld [vmem:[%s2 + $0x6a] sm:$0x1]
    %v95 = vadd.f32 %v93, %v94
    %v96 = vadd.f32 %v95, %v47
    %97 = vst.msk [vmem:[#allocation2 + $0x6] sm:$0x1] %vm54, %v96
    %s98 = sld [smem:[#allocation4 + $0x7]]
    %s99 = scalar_lea.vmem %s2, %s98
    %v100 = vld [vmem:[%s99] sm:$0x1]
    %v101 = vld [vmem:[%s2 + $0x6b] sm:$0x1]
    %v102 = vadd.f32 %v100, %v101
    %v103 = vadd.f32 %v102, %v47
    %104 = vst.msk [vmem:[#allocation2 + $0x7] sm:$0x1] %vm54, %v103
    %s105 = sld [smem:[#allocation4 + $0x80]]
    %s106 = scalar_lea.vmem %s2, %s105
    %v107 = vld [vmem:[%s106] sm:$0x1]
    %v108 = vld [vmem:[%s2 + $0x64] sm:$0x1]
    %v109 = vadd.f32 %v107, %v108
    %v110 = vadd.f32 %v109, %v47
    %111 = vst.msk [vmem:[#allocation2 + $0x8] sm:$0x1] %vm54, %v110
    %s112 = sld [smem:[#allocation4 + $0x81]]
    %s113 = scalar_lea.vmem %s2, %s112
    %v114 = vld [vmem:[%s113] sm:$0x1]
    %v115 = vld [vmem:[%s2 + $0x65] sm:$0x1]
    %v116 = vadd.f32 %v114, %v115
    %v117 = vadd.f32 %v116, %v47
    %118 = vst.msk [vmem:[#allocation2 + $0x9] sm:$0x1] %vm54, %v117
    %s119 = sld [smem:[#allocation4 + $0x82]]
    %s120 = scalar_lea.vmem %s2, %s119
    %v121 = vld [vmem:[%s120] sm:$0x1]
    %v122 = vld [vmem:[%s2 + $0x66] sm:$0x1]
    %v123 = vadd.f32 %v121, %v122
    %v124 = vadd.f32 %v123, %v47
    %125 = vst.msk [vmem:[#allocation2 + $0xa] sm:$0x1] %vm54, %v124
    %s126 = sld [smem:[#allocation4 + $0x83]]
    %s127 = scalar_lea.vmem %s2, %s126
    %v128 = vld [vmem:[%s127] sm:$0x1]
    %v129 = vld [vmem:[%s2 + $0x67] sm:$0x1]
    %v130 = vadd.f32 %v128, %v129
    %v131 = vadd.f32 %v130, %v47
    %132 = vst.msk [vmem:[#allocation2 + $0xb] sm:$0x1] %vm54, %v131
    %s133 = sld [smem:[#allocation4 + $0x84]]
    %s134 = scalar_lea.vmem %s2, %s133
    %v135 = vld [vmem:[%s134] sm:$0x1]
    %v136 = vld [vmem:[%s2 + $0x68] sm:$0x1]
    %v137 = vadd.f32 %v135, %v136
    %v138 = vadd.f32 %v137, %v47
    %139 = vst.msk [vmem:[#allocation2 + $0xc] sm:$0x1] %vm54, %v138
    %s140 = sld [smem:[#allocation4 + $0x85]]
    %s141 = scalar_lea.vmem %s2, %s140
    %v142 = vld [vmem:[%s141] sm:$0x1]
    %v143 = vld [vmem:[%s2 + $0x69] sm:$0x1]
    %v144 = vadd.f32 %v142, %v143
    %v145 = vadd.f32 %v144, %v47
    %146 = vst.msk [vmem:[#allocation2 + $0xd] sm:$0x1] %vm54, %v145
    %s147 = sld [smem:[#allocation4 + $0x86]]
    %s148 = scalar_lea.vmem %s2, %s147
    %v149 = vld [vmem:[%s148] sm:$0x1]
    %v150 = vld [vmem:[%s2 + $0x6a] sm:$0x1]
    %v151 = vadd.f32 %v149, %v150
    %v152 = vadd.f32 %v151, %v47
    %153 = vst.msk [vmem:[#allocation2 + $0xe] sm:$0x1] %vm54, %v152
    %s154 = sld [smem:[#allocation4 + $0x87]]
    %s155 = scalar_lea.vmem %s2, %s154
    %v156 = vld [vmem:[%s155] sm:$0x1]
    %v157 = vld [vmem:[%s2 + $0x6b] sm:$0x1]
    %v158 = vadd.f32 %v156, %v157
    %v159 = vadd.f32 %v158, %v47
    %160 = vst.msk [vmem:[#allocation2 + $0xf] sm:$0x1] %vm54, %v159
    %v161 = vld [vmem:[#allocation2] sm:$0xff]
    %v162 = vld [vmem:[#allocation2 + $0x8] sm:$0xff]
    %v163 = vld [vmem:[%s5] sm:$0x1]
    %v164 = vld [vmem:[%s5 + $0x1] sm:$0x1]
    %vm165 = vcmask 261120
    %v166 = vsel %vm165, %v161, 0.0
    %167 = vadd.xlane.f32.xlu0 %v166
    %v168 = vpop.xlane.xlu0 %167
    %v169 = vsel %vm165, %v162, 0.0
    %170 = vadd.xlane.f32.xlu0 %v169
    %v171 = vpop.xlane.xlu0 %170
    %v172 = vrcp.pop 32.0
    %v173 = vmul.f32 32.0, %v172
    %v174 = vsub.f32 1.0, %v173
    %v175 = vmul.f32 %v172, %v174
    %v176 = vadd.f32 %v172, %v175
    %vm177 = vweird.f32 %v172
    %v178 = vsel %vm177, %v172, %v176
    %v179 = vmul.f32 %v168, %v178
    %v180 = vmul.f32 %v171, %v178
    %v181 = vsub.f32 %v161, %v179
    %v182 = vsub.f32 %v162, %v180
    %v183 = vmul.f32 %v181, %v181
    %v184 = vmul.f32 %v182, %v182
    %v185 = vsel %vm165, %v183, 0.0
    %186 = vadd.xlane.f32.xlu0 %v185
    %v187 = vpop.xlane.xlu0 %186
    %v188 = vsel %vm165, %v184, 0.0
    %189 = vadd.xlane.f32.xlu0 %v188
    %v190 = vpop.xlane.xlu0 %189
    %v191 = vmul.f32 %v187, %v178
    %v192 = vmul.f32 %v190, %v178
    %v193 = vadd.f32 %v191, 1e-12
    %v194 = vadd.f32 %v192, 1e-12
    %v195 = vrsqrt.pop %v193
    %v196 = vmul.f32 %v195, %v193
    %v197 = vmul.f32 %v196, %v195
    %v198 = vmul.f32 0.5, %v197
    %v199 = vsub.f32 1.5, %v198
    %v200 = vmul.f32 %v195, %v199
    %vm201 = vweird.f32 %v193
    %vm202 = vweird.f32 %v195
    %vm203 = vmor %vm201, %vm202
    %v204 = vsel %vm203, %v195, %v200
    %v205 = vrsqrt.pop %v194
    %v206 = vmul.f32 %v205, %v194
    %v207 = vmul.f32 %v206, %v205
    %v208 = vmul.f32 0.5, %v207
    %v209 = vsub.f32 1.5, %v208
    %v210 = vmul.f32 %v205, %v209
    %vm211 = vweird.f32 %v194
    %vm212 = vweird.f32 %v205
    %vm213 = vmor %vm211, %vm212
    %v214 = vsel %vm213, %v205, %v210
    %v215 = vmul.f32 %v181, %v204
    %v216 = vmul.f32 %v182, %v214
    %v217 = vperm.slane %v163, 0
    %v218 = vmul.f32 %v215, %v217
    %v219 = vmul.f32 %v216, %v217
    %v220 = vperm.slane %v164, 0
    %v221 = vadd.f32 %v218, %v220
    %v222 = vadd.f32 %v219, %v220
    %v223 = vlaneseq
    %v224 = vshrl.u32 %v223, 7
    %v225 = vadd.s32 %v224, 8
    %v226 = vlaneseq
    %v227 = vand.u32 %v226, 127
    %vm228 = vcmp.ge.s32.totalorder %v224, 0
    %vm229 = vcmp.ge.s32.totalorder %v225, 0
    %vm230 = vcmp.lt.s32.totalorder %v224, 8
    %vm231 = vcmp.lt.s32.totalorder %v225, 8
    %vm232 = vmand %vm228, %vm230
    %vm233 = vmand %vm229, %vm231
    %vm234 = vcmp.ge.s32.totalorder %v227, 0
    %vm235 = vcmp.lt.s32.totalorder %v227, 8
    %vm236 = vmand %vm234, %vm235
    %vm237 = vmand %vm232, %vm236
    %vm238 = vmand %vm233, %vm236
    %vm239 = vcmp.ge.s32.totalorder %v224, 8
    %vm240 = vcmp.ge.s32.totalorder %v225, 8
    %vm241 = vcmp.lt.s32.totalorder %v224, 16
    %vm242 = vcmp.lt.s32.totalorder %v225, 16
    %vm243 = vmand %vm239, %vm241
    %vm244 = vmand %vm240, %vm242
    %vm245 = vcmp.ge.s32.totalorder %v227, 8
    %vm246 = vcmp.lt.s32.totalorder %v227, 16
    %vm247 = vmand %vm245, %vm246
    %vm248 = vmand %vm243, %vm247
    %vm249 = vmand %vm244, %vm247
    %vm250 = vmor %vm237, %vm248
    %vm251 = vmor %vm238, %vm249
    %v252 = vld [vmem:[%s1] sm:$0x1]
    %v253 = vperm.slane %v252, 0
    %vm254 = vcmp.gt.s32.totalorder %v253, 0
    %vm255 = vmand %vm250, %vm254
    %vm256 = vmand %vm251, %vm254
    %v257 = vsel %vm255, 0.0, -1e+09
    %v258 = vsel %vm256, 0.0, -1e+09
    %v259 = vld [vmem:[%s3] sm:$0xf]
    %v260 = vld [vmem:[%s3 + $0x20] sm:$0xf]
    %v261 = vld [vmem:[%s3 + $0x40] sm:$0xf]
    %v262 = vld [vmem:[%s3 + $0x60] sm:$0xf]
    %v263 = vld [vmem:[%s3 + $0x8] sm:$0xf]
    %v264 = vld [vmem:[%s3 + $0x28] sm:$0xf]
    %v265 = vld [vmem:[%s3 + $0x48] sm:$0xf]
    %v266 = vld [vmem:[%s3 + $0x68] sm:$0xf]
    %v267 = vld [vmem:[%s3 + $0x4] sm:$0xf]
    %v268 = vld [vmem:[%s3 + $0x24] sm:$0xf]
    %v269 = vld [vmem:[%s3 + $0x44] sm:$0xf]
    %v270 = vld [vmem:[%s3 + $0x64] sm:$0xf]
    %v271 = vld [vmem:[#allocation5] sm:$0xf]
    %v272 = vld [vmem:[#allocation5 + $0x8] sm:$0xf]
    %v273 = vld [vmem:[#allocation5 + $0x10] sm:$0xf]
    %v274 = vld [vmem:[#allocation5 + $0x18] sm:$0xf]
    %v275 = vld [vmem:[#allocation5 + $0x20] sm:$0xf]
    %v276 = vld [vmem:[#allocation5 + $0x28] sm:$0xf]
    %v277 = vld [vmem:[#allocation5 + $0x30] sm:$0xf]
    %v278 = vld [vmem:[#allocation5 + $0x38] sm:$0xf]
    %v279 = vpack.c.bf16 %v222, %v221
    %v280 = vld [vmem:[%s5 + $0x2] sm:$0x1]
    %v281 = vperm.slane %v280, 0
    %v286 = vunpack.c.l.b16 %v259
    %v287 = vunpack.c.l.b16 %v260
    %v288 = vunpack.c.l.b16 %v261
    %v289 = vunpack.c.l.b16 %v262
    %v290 = vpack.c.b16 %v287, %v286
    %v291 = vpack.c.b16 %v289, %v288
    %v295 = vsel %vm165, %v279, 0
    %297 = vmatpush.bf16.msra.mxu0 0
    %298 = vmatpush.bf16.msra.mxu0 0
    %299 = vmatpush.bf16.msra.mxu0 0
    %300 = vmatpush.bf16.msra.mxu0 0
    %301 = vmatpush.bf16.msra.mxu0 0
    %302 = vmatpush.bf16.msra.mxu0 0
    %303 = vmatpush.bf16.msra.mxu0 %v291
    %304 = vmatpush.bf16.msra.mxu0 %v290
    %305 = vmatmul.bf16.gmra.mxu0 %v295
    %v306 = vpop.f32.mrf.mxu0
    %v307 = vadd.f32 %v281, %v306
    %v308 = vpop.f32.mrf.mxu0
    %v309 = vadd.f32 %v281, %v308
    %310 = vdwg.mxu0
    %v311 = vpack.c.bf16 %v309, %v307
    %313 = vrot.lane.b32.xlu0 %v311, 96
    %v314 = vpop.permute.xlu0 %313
    %vm315 = vcmask 130048
    %v317 = vsel %vm315, %v311, 0
    %v320 = vsel %vm315, %v314, 0
    %322 = vmatpush.bf16.xpose.msra.mxu0 0
    %323 = vmatpush.bf16.xpose.msra.mxu0 0
    %324 = vmatpush.bf16.xpose.msra.mxu0 0
    %325 = vmatpush.bf16.xpose.msra.mxu0 0
    %326 = vmatpush.bf16.xpose.msra.mxu0 0
    %327 = vmatpush.bf16.xpose.msra.mxu0 0
    %328 = vmatpush.bf16.xpose.msra.mxu0 0
    %329 = vmatpush.bf16.xpose.msra.mxu0 %v320
    %330 = vmatmul.bf16.gmra.mxu0 %v317
    %v331 = vpop.f32.mrf.mxu0
    %v332 = vadd.f32 %v257, %v331
    %v333 = vpop.f32.mrf.mxu0
    %v334 = vadd.f32 %v258, %v333
    %335 = vdwg.mxu0
    %v336 = vsel %vm315, %v332, -inf
    %337 = vmax.xlane.f32.xlu0 %v336
    %v338 = vpop.xlane.xlu0 %337
    %v339 = vsel %vm315, %v334, -inf
    %340 = vmax.xlane.f32.xlu0 %v339
    %v341 = vpop.xlane.xlu0 %340
    %v342 = vsub.f32 %v332, %v338
    %v343 = vsub.f32 %v334, %v341
    %v344 = vmul.f32 %v342, 1.442695
    %v345 = vpow.pop %v344
    %v346 = vmul.f32 %v343, 1.442695
    %v347 = vpow.pop %v346
    %v348 = vsel %vm315, %v345, 0.0
    %349 = vadd.xlane.f32.xlu0 %v348
    %v350 = vpop.xlane.xlu0 %349
    %v351 = vsel %vm315, %v347, 0.0
    %352 = vadd.xlane.f32.xlu0 %v351
    %v353 = vpop.xlane.xlu0 %352
    %v354 = vrcp.pop %v350
    %v355 = vrcp.pop %v353
    %v356 = vmul.f32 %v345, %v354
    %v357 = vmul.f32 %v347, %v355
    %v358 = vpack.c.bf16 %v357, %v356
    %359 = vrot.lane.b32.xlu0 %v311, 64
    %v360 = vpop.permute.xlu0 %359
    %v363 = vsel %vm315, %v358, 0
    %365 = vmatpush.bf16.msra.mxu0 0
    %366 = vmatpush.bf16.msra.mxu0 0
    %367 = vmatpush.bf16.msra.mxu0 0
    %368 = vmatpush.bf16.msra.mxu0 0
    %369 = vmatpush.bf16.msra.mxu0 0
    %370 = vmatpush.bf16.msra.mxu0 0
    %371 = vmatpush.bf16.msra.mxu0 0
    %372 = vmatpush.bf16.msra.mxu0 %v360
    %373 = vmatmul.bf16.gmra.mxu0 %v363
    %v374 = vpop.f32.mrf.mxu0
    %v375 = vadd.f32 0.0, %v374
    %v376 = vpop.f32.mrf.mxu0
    %v377 = vadd.f32 0.0, %v376
    %378 = vdwg.mxu0
    %v379 = vpack.c.bf16 %v377, %v375
    %380 = vrot.lane.b32.xlu0 %v311, 112
    %v381 = vpop.permute.xlu0 %380
    %382 = vrot.lane.b32.xlu0 %v311, 80
    %v383 = vpop.permute.xlu0 %382
    %v385 = vsel %vm315, %v381, 0
    %v388 = vsel %vm315, %v383, 0
    %390 = vmatpush.bf16.xpose.msra.mxu0 0
    %391 = vmatpush.bf16.xpose.msra.mxu0 0
    %392 = vmatpush.bf16.xpose.msra.mxu0 0
    %393 = vmatpush.bf16.xpose.msra.mxu0 0
    %394 = vmatpush.bf16.xpose.msra.mxu0 0
    %395 = vmatpush.bf16.xpose.msra.mxu0 0
    %396 = vmatpush.bf16.xpose.msra.mxu0 0
    %397 = vmatpush.bf16.xpose.msra.mxu0 %v388
    %398 = vmatmul.bf16.gmra.mxu0 %v385
    %v399 = vpop.f32.mrf.mxu0
    %v400 = vadd.f32 %v257, %v399
    %v401 = vpop.f32.mrf.mxu0
    %v402 = vadd.f32 %v258, %v401
    %403 = vdwg.mxu0
    %v404 = vsel %vm315, %v400, -inf
    %405 = vmax.xlane.f32.xlu0 %v404
    %v406 = vpop.xlane.xlu0 %405
    %v407 = vsel %vm315, %v402, -inf
    %408 = vmax.xlane.f32.xlu0 %v407
    %v409 = vpop.xlane.xlu0 %408
    %v410 = vsub.f32 %v400, %v406
    %v411 = vsub.f32 %v402, %v409
    %v412 = vmul.f32 %v410, 1.442695
    %v413 = vpow.pop %v412
    %v414 = vmul.f32 %v411, 1.442695
    %v415 = vpow.pop %v414
    %v416 = vsel %vm315, %v413, 0.0
    %417 = vadd.xlane.f32.xlu0 %v416
    %v418 = vpop.xlane.xlu0 %417
    %v419 = vsel %vm315, %v415, 0.0
    %420 = vadd.xlane.f32.xlu0 %v419
    %v421 = vpop.xlane.xlu0 %420
    %v422 = vrcp.pop %v418
    %v423 = vrcp.pop %v421
    %v424 = vmul.f32 %v413, %v422
    %v425 = vmul.f32 %v415, %v423
    %v426 = vpack.c.bf16 %v425, %v424
    %427 = vrot.lane.b32.xlu0 %v311, 48
    %v428 = vpop.permute.xlu0 %427
    %v431 = vsel %vm315, %v426, 0
    %433 = vmatpush.bf16.msra.mxu0 0
    %434 = vmatpush.bf16.msra.mxu0 0
    %435 = vmatpush.bf16.msra.mxu0 0
    %436 = vmatpush.bf16.msra.mxu0 0
    %437 = vmatpush.bf16.msra.mxu0 0
    %438 = vmatpush.bf16.msra.mxu0 0
    %439 = vmatpush.bf16.msra.mxu0 0
    %440 = vmatpush.bf16.msra.mxu0 %v428
    %441 = vmatmul.bf16.gmra.mxu0 %v431
    %v442 = vpop.f32.mrf.mxu0
    %v443 = vadd.f32 0.0, %v442
    %v444 = vpop.f32.mrf.mxu0
    %v445 = vadd.f32 0.0, %v444
    %446 = vdwg.mxu0
    %v447 = vpack.c.bf16 %v445, %v443
    %v450 = vunpack.c.l.b16 %v265
    %v451 = vunpack.c.l.b16 %v266
    %v452 = vpack.c.b16 %v451, %v450
    %v455 = vsel %vm315, %v447, 0
    %457 = vmatpush.bf16.msra.mxu0 0
    %458 = vmatpush.bf16.msra.mxu0 0
    %459 = vmatpush.bf16.msra.mxu0 0
    %460 = vmatpush.bf16.msra.mxu0 0
    %461 = vmatpush.bf16.msra.mxu0 0
    %462 = vmatpush.bf16.msra.mxu0 0
    %463 = vmatpush.bf16.msra.mxu0 0
    %464 = vmatpush.bf16.msra.mxu0 %v452
    %465 = vmatmul.bf16.gmra.mxu0 %v455
    %v466 = vpop.f32.mrf.mxu0
    %v467 = vadd.f32 0.0, %v466
    %v468 = vpop.f32.mrf.mxu0
    %v469 = vadd.f32 0.0, %v468
    %470 = vdwg.mxu0
    %v473 = vunpack.c.l.b16 %v263
    %v474 = vunpack.c.l.b16 %v264
    %v475 = vpack.c.b16 %v474, %v473
    %v478 = vsel %vm315, %v379, 0
    %480 = vmatpush.bf16.msra.mxu0 0
    %481 = vmatpush.bf16.msra.mxu0 0
    %482 = vmatpush.bf16.msra.mxu0 0
    %483 = vmatpush.bf16.msra.mxu0 0
    %484 = vmatpush.bf16.msra.mxu0 0
    %485 = vmatpush.bf16.msra.mxu0 0
    %486 = vmatpush.bf16.msra.mxu0 0
    %487 = vmatpush.bf16.msra.mxu0 %v475
    %488 = vmatmul.bf16.gmra.mxu0 %v478
    %v489 = vpop.f32.mrf.mxu0
    %v490 = vadd.f32 %v467, %v489
    %v491 = vpop.f32.mrf.mxu0
    %v492 = vadd.f32 %v469, %v491
    %493 = vdwg.mxu0
    %v494 = vld [vmem:[%s5 + $0x3] sm:$0x1]
    %v495 = vperm.slane %v494, 0
    %v496 = vadd.f32 %v490, %v495
    %v497 = vadd.f32 %v492, %v495
    %v498 = vadd.f32 %v496, %v221
    %v499 = vadd.f32 %v497, %v222
    %v500 = vld [vmem:[%s5 + $0x4] sm:$0x1]
    %v501 = vld [vmem:[%s5 + $0x5] sm:$0x1]
    %v502 = vsel %vm165, %v498, 0.0
    %503 = vadd.xlane.f32.xlu0 %v502
    %v504 = vpop.xlane.xlu0 %503
    %v505 = vsel %vm165, %v499, 0.0
    %506 = vadd.xlane.f32.xlu0 %v505
    %v507 = vpop.xlane.xlu0 %506
    %v508 = vmul.f32 %v504, %v178
    %v509 = vmul.f32 %v507, %v178
    %v510 = vsub.f32 %v498, %v508
    %v511 = vsub.f32 %v499, %v509
    %v512 = vmul.f32 %v510, %v510
    %v513 = vmul.f32 %v511, %v511
    %v514 = vsel %vm165, %v512, 0.0
    %515 = vadd.xlane.f32.xlu0 %v514
    %v516 = vpop.xlane.xlu0 %515
    %v517 = vsel %vm165, %v513, 0.0
    %518 = vadd.xlane.f32.xlu0 %v517
    %v519 = vpop.xlane.xlu0 %518
    %v520 = vmul.f32 %v516, %v178
    %v521 = vmul.f32 %v519, %v178
    %v522 = vadd.f32 %v520, 1e-12
    %v523 = vadd.f32 %v521, 1e-12
    %v524 = vrsqrt.pop %v522
    %v525 = vmul.f32 %v524, %v522
    %v526 = vmul.f32 %v525, %v524
    %v527 = vmul.f32 0.5, %v526
    %v528 = vsub.f32 1.5, %v527
    %v529 = vmul.f32 %v524, %v528
    %vm530 = vweird.f32 %v522
    %vm531 = vweird.f32 %v524
    %vm532 = vmor %vm530, %vm531
    %v533 = vsel %vm532, %v524, %v529
    %v534 = vrsqrt.pop %v523
    %v535 = vmul.f32 %v534, %v523
    %v536 = vmul.f32 %v535, %v534
    %v537 = vmul.f32 0.5, %v536
    %v538 = vsub.f32 1.5, %v537
    %v539 = vmul.f32 %v534, %v538
    %vm540 = vweird.f32 %v523
    %vm541 = vweird.f32 %v534
    %vm542 = vmor %vm540, %vm541
    %v543 = vsel %vm542, %v534, %v539
    %v544 = vmul.f32 %v510, %v533
    %v545 = vmul.f32 %v511, %v543
    %v546 = vperm.slane %v500, 0
    %v547 = vmul.f32 %v544, %v546
    %v548 = vmul.f32 %v545, %v546
    %v549 = vperm.slane %v501, 0
    %v550 = vadd.f32 %v547, %v549
    %v551 = vadd.f32 %v548, %v549
    %v552 = vpack.c.bf16 %v551, %v550
    %v553 = vld [vmem:[%s5 + $0x6] sm:$0x1]
    %v554 = vperm.slane %v553, 0
    %v559 = vunpack.c.l.b16 %v267
    %v560 = vunpack.c.l.b16 %v268
    %v561 = vunpack.c.l.b16 %v269
    %v562 = vunpack.c.l.b16 %v270
    %v563 = vpack.c.b16 %v560, %v559
    %v564 = vpack.c.b16 %v562, %v561
    %v568 = vsel %vm165, %v552, 0
    %570 = vmatpush.bf16.msra.mxu0 0
    %571 = vmatpush.bf16.msra.mxu0 0
    %572 = vmatpush.bf16.msra.mxu0 0
    %573 = vmatpush.bf16.msra.mxu0 0
    %574 = vmatpush.bf16.msra.mxu0 0
    %575 = vmatpush.bf16.msra.mxu0 0
    %576 = vmatpush.bf16.msra.mxu0 %v564
    %577 = vmatpush.bf16.msra.mxu0 %v563
    %578 = vmatmul.bf16.gmra.mxu0 %v568
    %v579 = vpop.f32.mrf.mxu0
    %v580 = vadd.f32 %v554, %v579
    %v581 = vpop.f32.mrf.mxu0
    %v582 = vadd.f32 %v554, %v581
    %583 = vdwg.mxu0
    %v584 = vmul.f32 %v580, 0.5
    %v585 = vmul.f32 %v582, 0.5
    %v586 = vmul.f32 %v580, 0.044715
    %v587 = vmul.f32 %v582, 0.044715
    %v588 = vmul.f32 %v586, %v580
    %v589 = vmul.f32 %v587, %v582
    %v590 = vmul.f32 %v588, %v580
    %v591 = vmul.f32 %v589, %v582
    %v592 = vadd.f32 %v580, %v590
    %v593 = vadd.f32 %v582, %v591
    %v594 = vmul.f32 %v592, 0.7978846
    %v595 = vmul.f32 %v593, 0.7978846
    %v596 = vtanh.pop %v594
    %v597 = vtanh.pop %v595
    %v598 = vadd.f32 %v596, 1.0
    %v599 = vadd.f32 %v597, 1.0
    %v600 = vmul.f32 %v584, %v598
    %v601 = vmul.f32 %v585, %v599
    %v602 = vpack.c.bf16 %v601, %v600
    %v603 = vld [vmem:[%s5 + $0x7] sm:$0x1]
    %v604 = vperm.slane %v603, 0
    %v613 = vunpack.c.l.b16 %v271
    %v614 = vunpack.c.l.b16 %v272
    %v615 = vunpack.c.l.b16 %v273
    %v616 = vunpack.c.l.b16 %v274
    %v617 = vunpack.c.l.b16 %v275
    %v618 = vunpack.c.l.b16 %v276
    %v619 = vunpack.c.l.b16 %v277
    %v620 = vunpack.c.l.b16 %v278
    %v621 = vpack.c.b16 %v614, %v613
    %v622 = vpack.c.b16 %v616, %v615
    %v623 = vpack.c.b16 %v618, %v617
    %v624 = vpack.c.b16 %v620, %v619
    %vm629 = vcmask 523264
    %v631 = vsel %vm629, %v602, 0
    %633 = vmatpush.bf16.msra.mxu0 0
    %634 = vmatpush.bf16.msra.mxu0 0
    %635 = vmatpush.bf16.msra.mxu0 0
    %636 = vmatpush.bf16.msra.mxu0 0
    %637 = vmatpush.bf16.msra.mxu0 %v624
    %638 = vmatpush.bf16.msra.mxu0 %v623
    %639 = vmatpush.bf16.msra.mxu0 %v622
    %640 = vmatpush.bf16.msra.mxu0 %v621
    %641 = vmatmul.bf16.gmra.mxu0 %v631
    %v642 = vpop.f32.mrf.mxu0
    %v643 = vadd.f32 %v604, %v642
    %v644 = vpop.f32.mrf.mxu0
    %v645 = vadd.f32 %v604, %v644
    %646 = vdwg.mxu0
    %v647 = vadd.f32 %v643, %v550
    %v648 = vadd.f32 %v645, %v551
    %v649 = vld [vmem:[%s5 + $0x8] sm:$0x1]
    %v650 = vld [vmem:[%s5 + $0x9] sm:$0x1]
    %v651 = vsel %vm165, %v647, 0.0
    %652 = vadd.xlane.f32.xlu0 %v651
    %v653 = vpop.xlane.xlu0 %652
    %v654 = vsel %vm165, %v648, 0.0
    %655 = vadd.xlane.f32.xlu0 %v654
    %v656 = vpop.xlane.xlu0 %655
    %v657 = vmul.f32 %v653, %v178
    %v658 = vmul.f32 %v656, %v178
    %v659 = vsub.f32 %v647, %v657
    %v660 = vsub.f32 %v648, %v658
    %v661 = vmul.f32 %v659, %v659
    %v662 = vmul.f32 %v660, %v660
    %v663 = vsel %vm165, %v661, 0.0
    %664 = vadd.xlane.f32.xlu0 %v663
    %v665 = vpop.xlane.xlu0 %664
    %v666 = vsel %vm165, %v662, 0.0
    %667 = vadd.xlane.f32.xlu0 %v666
    %v668 = vpop.xlane.xlu0 %667
    %v669 = vmul.f32 %v665, %v178
    %v670 = vmul.f32 %v668, %v178
    %v671 = vadd.f32 %v669, 1e-12
    %v672 = vadd.f32 %v670, 1e-12
    %v673 = vrsqrt.pop %v671
    %v674 = vmul.f32 %v673, %v671
    %v675 = vmul.f32 %v674, %v673
    %v676 = vmul.f32 0.5, %v675
    %v677 = vsub.f32 1.5, %v676
    %v678 = vmul.f32 %v673, %v677
    %vm679 = vweird.f32 %v671
    %vm680 = vweird.f32 %v673
    %vm681 = vmor %vm679, %vm680
    %v682 = vsel %vm681, %v673, %v678
    %v683 = vrsqrt.pop %v672
    %v684 = vmul.f32 %v683, %v672
    %v685 = vmul.f32 %v684, %v683
    %v686 = vmul.f32 0.5, %v685
    %v687 = vsub.f32 1.5, %v686
    %v688 = vmul.f32 %v683, %v687
    %vm689 = vweird.f32 %v672
    %vm690 = vweird.f32 %v683
    %vm691 = vmor %vm689, %vm690
    %v692 = vsel %vm691, %v683, %v688
    %v693 = vmul.f32 %v659, %v682
    %v694 = vmul.f32 %v660, %v692
    %v695 = vperm.slane %v649, 0
    %v696 = vmul.f32 %v693, %v695
    %v697 = vmul.f32 %v694, %v695
    %v698 = vperm.slane %v650, 0
    %v699 = vadd.f32 %v696, %v698
    %v700 = vadd.f32 %v697, %v698
    %v701 = vld [vmem:[%s3 + $0xc] sm:$0xf]
    %v702 = vld [vmem:[%s3 + $0x2c] sm:$0xf]
    %v703 = vld [vmem:[%s3 + $0x4c] sm:$0xf]
    %v704 = vld [vmem:[%s3 + $0x6c] sm:$0xf]
    %v705 = vld [vmem:[%s3 + $0x14] sm:$0xf]
    %v706 = vld [vmem:[%s3 + $0x34] sm:$0xf]
    %v707 = vld [vmem:[%s3 + $0x54] sm:$0xf]
    %v708 = vld [vmem:[%s3 + $0x74] sm:$0xf]
    %v709 = vld [vmem:[%s3 + $0x10] sm:$0xf]
    %v710 = vld [vmem:[%s3 + $0x30] sm:$0xf]
    %v711 = vld [vmem:[%s3 + $0x50] sm:$0xf]
    %v712 = vld [vmem:[%s3 + $0x70] sm:$0xf]
    %v713 = vld [vmem:[#allocation5 + $0x4] sm:$0xf]
    %v714 = vld [vmem:[#allocation5 + $0xc] sm:$0xf]
    %v715 = vld [vmem:[#allocation5 + $0x14] sm:$0xf]
    %v716 = vld [vmem:[#allocation5 + $0x1c] sm:$0xf]
    %v717 = vld [vmem:[#allocation5 + $0x24] sm:$0xf]
    %v718 = vld [vmem:[#allocation5 + $0x2c] sm:$0xf]
    %v719 = vld [vmem:[#allocation5 + $0x34] sm:$0xf]
    %v720 = vld [vmem:[#allocation5 + $0x3c] sm:$0xf]
    %v721 = vpack.c.bf16 %v700, %v699
    %v722 = vld [vmem:[%s5 + $0xa] sm:$0x1]
    %v723 = vperm.slane %v722, 0
    %v728 = vunpack.c.l.b16 %v701
    %v729 = vunpack.c.l.b16 %v702
    %v730 = vunpack.c.l.b16 %v703
    %v731 = vunpack.c.l.b16 %v704
    %v732 = vpack.c.b16 %v729, %v728
    %v733 = vpack.c.b16 %v731, %v730
    %v737 = vsel %vm165, %v721, 0
    %739 = vmatpush.bf16.msra.mxu0 0
    %740 = vmatpush.bf16.msra.mxu0 0
    %741 = vmatpush.bf16.msra.mxu0 0
    %742 = vmatpush.bf16.msra.mxu0 0
    %743 = vmatpush.bf16.msra.mxu0 0
    %744 = vmatpush.bf16.msra.mxu0 0
    %745 = vmatpush.bf16.msra.mxu0 %v733
    %746 = vmatpush.bf16.msra.mxu0 %v732
    %747 = vmatmul.bf16.gmra.mxu0 %v737
    %v748 = vpop.f32.mrf.mxu0
    %v749 = vadd.f32 %v723, %v748
    %v750 = vpop.f32.mrf.mxu0
    %v751 = vadd.f32 %v723, %v750
    %752 = vdwg.mxu0
    %v753 = vpack.c.bf16 %v751, %v749
    %755 = vrot.lane.b32.xlu0 %v753, 96
    %v756 = vpop.permute.xlu0 %755
    %v758 = vsel %vm315, %v753, 0
    %v761 = vsel %vm315, %v756, 0
    %763 = vmatpush.bf16.xpose.msra.mxu0 0
    %764 = vmatpush.bf16.xpose.msra.mxu0 0
    %765 = vmatpush.bf16.xpose.msra.mxu0 0
    %766 = vmatpush.bf16.xpose.msra.mxu0 0
    %767 = vmatpush.bf16.xpose.msra.mxu0 0
    %768 = vmatpush.bf16.xpose.msra.mxu0 0
    %769 = vmatpush.bf16.xpose.msra.mxu0 0
    %770 = vmatpush.bf16.xpose.msra.mxu0 %v761
    %771 = vmatmul.bf16.gmra.mxu0 %v758
    %v772 = vpop.f32.mrf.mxu0
    %v773 = vadd.f32 %v257, %v772
    %v774 = vpop.f32.mrf.mxu0
    %v775 = vadd.f32 %v258, %v774
    %776 = vdwg.mxu0
    %v777 = vsel %vm315, %v773, -inf
    %778 = vmax.xlane.f32.xlu0 %v777
    %v779 = vpop.xlane.xlu0 %778
    %v780 = vsel %vm315, %v775, -inf
    %781 = vmax.xlane.f32.xlu0 %v780
    %v782 = vpop.xlane.xlu0 %781
    %v783 = vsub.f32 %v773, %v779
    %v784 = vsub.f32 %v775, %v782
    %v785 = vmul.f32 %v783, 1.442695
    %v786 = vpow.pop %v785
    %v787 = vmul.f32 %v784, 1.442695
    %v788 = vpow.pop %v787
    %v789 = vsel %vm315, %v786, 0.0
    %790 = vadd.xlane.f32.xlu0 %v789
    %v791 = vpop.xlane.xlu0 %790
    %v792 = vsel %vm315, %v788, 0.0
    %793 = vadd.xlane.f32.xlu0 %v792
    %v794 = vpop.xlane.xlu0 %793
    %v795 = vrcp.pop %v791
    %v796 = vrcp.pop %v794
    %v797 = vmul.f32 %v786, %v795
    %v798 = vmul.f32 %v788, %v796
    %v799 = vpack.c.bf16 %v798, %v797
    %800 = vrot.lane.b32.xlu0 %v753, 64
    %v801 = vpop.permute.xlu0 %800
    %v804 = vsel %vm315, %v799, 0
    %806 = vmatpush.bf16.msra.mxu0 0
    %807 = vmatpush.bf16.msra.mxu0 0
    %808 = vmatpush.bf16.msra.mxu0 0
    %809 = vmatpush.bf16.msra.mxu0 0
    %810 = vmatpush.bf16.msra.mxu0 0
    %811 = vmatpush.bf16.msra.mxu0 0
    %812 = vmatpush.bf16.msra.mxu0 0
    %813 = vmatpush.bf16.msra.mxu0 %v801
    %814 = vmatmul.bf16.gmra.mxu0 %v804
    %v815 = vpop.f32.mrf.mxu0
    %v816 = vadd.f32 0.0, %v815
    %v817 = vpop.f32.mrf.mxu0
    %v818 = vadd.f32 0.0, %v817
    %819 = vdwg.mxu0
    %v820 = vpack.c.bf16 %v818, %v816
    %821 = vrot.lane.b32.xlu0 %v753, 112
    %v822 = vpop.permute.xlu0 %821
    %823 = vrot.lane.b32.xlu0 %v753, 80
    %v824 = vpop.permute.xlu0 %823
    %v826 = vsel %vm315, %v822, 0
    %v829 = vsel %vm315, %v824, 0
    %831 = vmatpush.bf16.xpose.msra.mxu0 0
    %832 = vmatpush.bf16.xpose.msra.mxu0 0
    %833 = vmatpush.bf16.xpose.msra.mxu0 0
    %834 = vmatpush.bf16.xpose.msra.mxu0 0
    %835 = vmatpush.bf16.xpose.msra.mxu0 0
    %836 = vmatpush.bf16.xpose.msra.mxu0 0
    %837 = vmatpush.bf16.xpose.msra.mxu0 0
    %838 = vmatpush.bf16.xpose.msra.mxu0 %v829
    %839 = vmatmul.bf16.gmra.mxu0 %v826
    %v840 = vpop.f32.mrf.mxu0
    %v841 = vadd.f32 %v257, %v840
    %v842 = vpop.f32.mrf.mxu0
    %v843 = vadd.f32 %v258, %v842
    %844 = vdwg.mxu0
    %v845 = vsel %vm315, %v841, -inf
    %846 = vmax.xlane.f32.xlu0 %v845
    %v847 = vpop.xlane.xlu0 %846
    %v848 = vsel %vm315, %v843, -inf
    %849 = vmax.xlane.f32.xlu0 %v848
    %v850 = vpop.xlane.xlu0 %849
    %v851 = vsub.f32 %v841, %v847
    %v852 = vsub.f32 %v843, %v850
    %v853 = vmul.f32 %v851, 1.442695
    %v854 = vpow.pop %v853
    %v855 = vmul.f32 %v852, 1.442695
    %v856 = vpow.pop %v855
    %v857 = vsel %vm315, %v854, 0.0
    %858 = vadd.xlane.f32.xlu0 %v857
    %v859 = vpop.xlane.xlu0 %858
    %v860 = vsel %vm315, %v856, 0.0
    %861 = vadd.xlane.f32.xlu0 %v860
    %v862 = vpop.xlane.xlu0 %861
    %v863 = vrcp.pop %v859
    %v864 = vrcp.pop %v862
    %v865 = vmul.f32 %v854, %v863
    %v866 = vmul.f32 %v856, %v864
    %v867 = vpack.c.bf16 %v866, %v865
    %868 = vrot.lane.b32.xlu0 %v753, 48
    %v869 = vpop.permute.xlu0 %868
    %v872 = vsel %vm315, %v867, 0
    %874 = vmatpush.bf16.msra.mxu0 0
    %875 = vmatpush.bf16.msra.mxu0 0
    %876 = vmatpush.bf16.msra.mxu0 0
    %877 = vmatpush.bf16.msra.mxu0 0
    %878 = vmatpush.bf16.msra.mxu0 0
    %879 = vmatpush.bf16.msra.mxu0 0
    %880 = vmatpush.bf16.msra.mxu0 0
    %881 = vmatpush.bf16.msra.mxu0 %v869
    %882 = vmatmul.bf16.gmra.mxu0 %v872
    %v883 = vpop.f32.mrf.mxu0
    %v884 = vadd.f32 0.0, %v883
    %v885 = vpop.f32.mrf.mxu0
    %v886 = vadd.f32 0.0, %v885
    %887 = vdwg.mxu0
    %v888 = vpack.c.bf16 %v886, %v884
    %v891 = vunpack.c.l.b16 %v707
    %v892 = vunpack.c.l.b16 %v708
    %v893 = vpack.c.b16 %v892, %v891
    %v896 = vsel %vm315, %v888, 0
    %898 = vmatpush.bf16.msra.mxu0 0
    %899 = vmatpush.bf16.msra.mxu0 0
    %900 = vmatpush.bf16.msra.mxu0 0
    %901 = vmatpush.bf16.msra.mxu0 0
    %902 = vmatpush.bf16.msra.mxu0 0
    %903 = vmatpush.bf16.msra.mxu0 0
    %904 = vmatpush.bf16.msra.mxu0 0
    %905 = vmatpush.bf16.msra.mxu0 %v893
    %906 = vmatmul.bf16.gmra.mxu0 %v896
    %v907 = vpop.f32.mrf.mxu0
    %v908 = vadd.f32 0.0, %v907
    %v909 = vpop.f32.mrf.mxu0
    %v910 = vadd.f32 0.0, %v909
    %911 = vdwg.mxu0
    %v914 = vunpack.c.l.b16 %v705
    %v915 = vunpack.c.l.b16 %v706
    %v916 = vpack.c.b16 %v915, %v914
    %v919 = vsel %vm315, %v820, 0
    %921 = vmatpush.bf16.msra.mxu0 0
    %922 = vmatpush.bf16.msra.mxu0 0
    %923 = vmatpush.bf16.msra.mxu0 0
    %924 = vmatpush.bf16.msra.mxu0 0
    %925 = vmatpush.bf16.msra.mxu0 0
    %926 = vmatpush.bf16.msra.mxu0 0
    %927 = vmatpush.bf16.msra.mxu0 0
    %928 = vmatpush.bf16.msra.mxu0 %v916
    %929 = vmatmul.bf16.gmra.mxu0 %v919
    %v930 = vpop.f32.mrf.mxu0
    %v931 = vadd.f32 %v908, %v930
    %v932 = vpop.f32.mrf.mxu0
    %v933 = vadd.f32 %v910, %v932
    %934 = vdwg.mxu0
    %v935 = vld [vmem:[%s5 + $0xb] sm:$0x1]
    %v936 = vperm.slane %v935, 0
    %v937 = vadd.f32 %v931, %v936
    %v938 = vadd.f32 %v933, %v936
    %v939 = vadd.f32 %v937, %v699
    %v940 = vadd.f32 %v938, %v700
    %v941 = vld [vmem:[%s5 + $0xc] sm:$0x1]
    %v942 = vld [vmem:[%s5 + $0xd] sm:$0x1]
    %v943 = vsel %vm165, %v939, 0.0
    %944 = vadd.xlane.f32.xlu0 %v943
    %v945 = vpop.xlane.xlu0 %944
    %v946 = vsel %vm165, %v940, 0.0
    %947 = vadd.xlane.f32.xlu0 %v946
    %v948 = vpop.xlane.xlu0 %947
    %v949 = vmul.f32 %v945, %v178
    %v950 = vmul.f32 %v948, %v178
    %v951 = vsub.f32 %v939, %v949
    %v952 = vsub.f32 %v940, %v950
    %v953 = vmul.f32 %v951, %v951
    %v954 = vmul.f32 %v952, %v952
    %v955 = vsel %vm165, %v953, 0.0
    %956 = vadd.xlane.f32.xlu0 %v955
    %v957 = vpop.xlane.xlu0 %956
    %v958 = vsel %vm165, %v954, 0.0
    %959 = vadd.xlane.f32.xlu0 %v958
    %v960 = vpop.xlane.xlu0 %959
    %v961 = vmul.f32 %v957, %v178
    %v962 = vmul.f32 %v960, %v178
    %v963 = vadd.f32 %v961, 1e-12
    %v964 = vadd.f32 %v962, 1e-12
    %v965 = vrsqrt.pop %v963
    %v966 = vmul.f32 %v965, %v963
    %v967 = vmul.f32 %v966, %v965
    %v968 = vmul.f32 0.5, %v967
    %v969 = vsub.f32 1.5, %v968
    %v970 = vmul.f32 %v965, %v969
    %vm971 = vweird.f32 %v963
    %vm972 = vweird.f32 %v965
    %vm973 = vmor %vm971, %vm972
    %v974 = vsel %vm973, %v965, %v970
    %v975 = vrsqrt.pop %v964
    %v976 = vmul.f32 %v975, %v964
    %v977 = vmul.f32 %v976, %v975
    %v978 = vmul.f32 0.5, %v977
    %v979 = vsub.f32 1.5, %v978
    %v980 = vmul.f32 %v975, %v979
    %vm981 = vweird.f32 %v964
    %vm982 = vweird.f32 %v975
    %vm983 = vmor %vm981, %vm982
    %v984 = vsel %vm983, %v975, %v980
    %v985 = vmul.f32 %v951, %v974
    %v986 = vmul.f32 %v952, %v984
    %v987 = vperm.slane %v941, 0
    %v988 = vmul.f32 %v985, %v987
    %v989 = vmul.f32 %v986, %v987
    %v990 = vperm.slane %v942, 0
    %v991 = vadd.f32 %v988, %v990
    %v992 = vadd.f32 %v989, %v990
    %v993 = vpack.c.bf16 %v992, %v991
    %v994 = vld [vmem:[%s5 + $0xe] sm:$0x1]
    %v995 = vperm.slane %v994, 0
    %v1000 = vunpack.c.l.b16 %v709
    %v1001 = vunpack.c.l.b16 %v710
    %v1002 = vunpack.c.l.b16 %v711
    %v1003 = vunpack.c.l.b16 %v712
    %v1004 = vpack.c.b16 %v1001, %v1000
    %v1005 = vpack.c.b16 %v1003, %v1002
    %v1009 = vsel %vm165, %v993, 0
    %1011 = vmatpush.bf16.msra.mxu0 0
    %1012 = vmatpush.bf16.msra.mxu0 0
    %1013 = vmatpush.bf16.msra.mxu0 0
    %1014 = vmatpush.bf16.msra.mxu0 0
    %1015 = vmatpush.bf16.msra.mxu0 0
    %1016 = vmatpush.bf16.msra.mxu0 0
    %1017 = vmatpush.bf16.msra.mxu0 %v1005
    %1018 = vmatpush.bf16.msra.mxu0 %v1004
    %1019 = vmatmul.bf16.gmra.mxu0 %v1009
    %v1020 = vpop.f32.mrf.mxu0
    %v1021 = vadd.f32 %v995, %v1020
    %v1022 = vpop.f32.mrf.mxu0
    %v1023 = vadd.f32 %v995, %v1022
    %1024 = vdwg.mxu0
    %v1025 = vmul.f32 %v1021, 0.5
    %v1026 = vmul.f32 %v1023, 0.5
    %v1027 = vmul.f32 %v1021, 0.044715
    %v1028 = vmul.f32 %v1023, 0.044715
    %v1029 = vmul.f32 %v1027, %v1021
    %v1030 = vmul.f32 %v1028, %v1023
    %v1031 = vmul.f32 %v1029, %v1021
    %v1032 = vmul.f32 %v1030, %v1023
    %v1033 = vadd.f32 %v1021, %v1031
    %v1034 = vadd.f32 %v1023, %v1032
    %v1035 = vmul.f32 %v1033, 0.7978846
    %v1036 = vmul.f32 %v1034, 0.7978846
    %v1037 = vtanh.pop %v1035
    %v1038 = vtanh.pop %v1036
    %v1039 = vadd.f32 %v1037, 1.0
    %v1040 = vadd.f32 %v1038, 1.0
    %v1041 = vmul.f32 %v1025, %v1039
    %v1042 = vmul.f32 %v1026, %v1040
    %v1043 = vpack.c.bf16 %v1042, %v1041
    %v1044 = vld [vmem:[%s5 + $0xf] sm:$0x1]
    %v1045 = vperm.slane %v1044, 0
    %v1054 = vunpack.c.l.b16 %v713
    %v1055 = vunpack.c.l.b16 %v714
    %v1056 = vunpack.c.l.b16 %v715
    %v1057 = vunpack.c.l.b16 %v716
    %v1058 = vunpack.c.l.b16 %v717
    %v1059 = vunpack.c.l.b16 %v718
    %v1060 = vunpack.c.l.b16 %v719
    %v1061 = vunpack.c.l.b16 %v720
    %v1062 = vpack.c.b16 %v1055, %v1054
    %v1063 = vpack.c.b16 %v1057, %v1056
    %v1064 = vpack.c.b16 %v1059, %v1058
    %v1065 = vpack.c.b16 %v1061, %v1060
    %v1071 = vsel %vm629, %v1043, 0
    %1073 = vmatpush.bf16.msra.mxu0 0
    %1074 = vmatpush.bf16.msra.mxu0 0
    %1075 = vmatpush.bf16.msra.mxu0 0
    %1076 = vmatpush.bf16.msra.mxu0 0
    %1077 = vmatpush.bf16.msra.mxu0 %v1065
    %1078 = vmatpush.bf16.msra.mxu0 %v1064
    %1079 = vmatpush.bf16.msra.mxu0 %v1063
    %1080 = vmatpush.bf16.msra.mxu0 %v1062
    %1081 = vmatmul.bf16.gmra.mxu0 %v1071
    %v1082 = vpop.f32.mrf.mxu0
    %v1083 = vadd.f32 %v1045, %v1082
    %v1084 = vpop.f32.mrf.mxu0
    %v1085 = vadd.f32 %v1045, %v1084
    %1086 = vdwg.mxu0
    %v1087 = vadd.f32 %v1083, %v991
    %v1088 = vadd.f32 %v1085, %v992
    %v1089 = vld [vmem:[%s5 + $0x10] sm:$0x1]
    %v1090 = vld [vmem:[%s5 + $0x11] sm:$0x1]
    %v1091 = vsel %vm165, %v1087, 0.0
    %1092 = vadd.xlane.f32.xlu0 %v1091
    %v1093 = vpop.xlane.xlu0 %1092
    %v1094 = vsel %vm165, %v1088, 0.0
    %1095 = vadd.xlane.f32.xlu0 %v1094
    %v1096 = vpop.xlane.xlu0 %1095
    %v1097 = vmul.f32 %v1093, %v178
    %v1098 = vmul.f32 %v1096, %v178
    %v1099 = vsub.f32 %v1087, %v1097
    %v1100 = vsub.f32 %v1088, %v1098
    %v1101 = vmul.f32 %v1099, %v1099
    %v1102 = vmul.f32 %v1100, %v1100
    %v1103 = vsel %vm165, %v1101, 0.0
    %1104 = vadd.xlane.f32.xlu0 %v1103
    %v1105 = vpop.xlane.xlu0 %1104
    %v1106 = vsel %vm165, %v1102, 0.0
    %1107 = vadd.xlane.f32.xlu0 %v1106
    %v1108 = vpop.xlane.xlu0 %1107
    %v1109 = vmul.f32 %v1105, %v178
    %v1110 = vmul.f32 %v1108, %v178
    %v1111 = vadd.f32 %v1109, 1e-12
    %v1112 = vadd.f32 %v1110, 1e-12
    %v1113 = vrsqrt.pop %v1111
    %v1114 = vmul.f32 %v1113, %v1111
    %v1115 = vmul.f32 %v1114, %v1113
    %v1116 = vmul.f32 0.5, %v1115
    %v1117 = vsub.f32 1.5, %v1116
    %v1118 = vmul.f32 %v1113, %v1117
    %vm1119 = vweird.f32 %v1111
    %vm1120 = vweird.f32 %v1113
    %vm1121 = vmor %vm1119, %vm1120
    %v1122 = vsel %vm1121, %v1113, %v1118
    %v1123 = vrsqrt.pop %v1112
    %v1124 = vmul.f32 %v1123, %v1112
    %v1125 = vmul.f32 %v1124, %v1123
    %v1126 = vmul.f32 0.5, %v1125
    %v1127 = vsub.f32 1.5, %v1126
    %v1128 = vmul.f32 %v1123, %v1127
    %vm1129 = vweird.f32 %v1112
    %vm1130 = vweird.f32 %v1123
    %vm1131 = vmor %vm1129, %vm1130
    %v1132 = vsel %vm1131, %v1123, %v1128
    %v1133 = vmul.f32 %v1099, %v1122
    %v1134 = vmul.f32 %v1100, %v1132
    %v1135 = vperm.slane %v1089, 0
    %v1136 = vmul.f32 %v1133, %v1135
    %v1137 = vmul.f32 %v1134, %v1135
    %v1138 = vperm.slane %v1090, 0
    %v1139 = vadd.f32 %v1136, %v1138
    %v1140 = vadd.f32 %v1137, %v1138
    %v1142 = vrot.slane %v1140, 7
    %vm1144 = vcmask 1040384
    %v1145 = vsel %vm1144, %v1139, %v1142
    %v1146 = vld [vmem:[%s3 + $0x18] sm:$0xf]
    %v1147 = vld [vmem:[%s3 + $0x38] sm:$0xf]
    %v1148 = vld [vmem:[%s3 + $0x58] sm:$0xf]
    %v1149 = vld [vmem:[%s3 + $0x78] sm:$0xf]
    %v1150 = vld [vmem:[%s3 + $0x1c] sm:$0xf]
    %v1151 = vld [vmem:[%s3 + $0x3c] sm:$0xf]
    %v1152 = vld [vmem:[%s3 + $0x5c] sm:$0xf]
    %v1153 = vld [vmem:[%s3 + $0x7c] sm:$0xf]
    %v1154 = vpack.c.bf16 %v1145, %v1145
    %v1155 = vld [vmem:[%s5 + $0x12] sm:$0x1]
    %v1156 = vperm.slane %v1155, 0
    %v1161 = vunpack.c.l.b16 %v1146
    %v1162 = vunpack.c.l.b16 %v1147
    %v1163 = vunpack.c.l.b16 %v1148
    %v1164 = vunpack.c.l.b16 %v1149
    %v1165 = vpack.c.b16 %v1162, %v1161
    %v1166 = vpack.c.b16 %v1164, %v1163
    %v1170 = vsel %vm165, %v1154, 0
    %1172 = vmatpush.bf16.msra.mxu0 0
    %1173 = vmatpush.bf16.msra.mxu0 0
    %1174 = vmatpush.bf16.msra.mxu0 0
    %1175 = vmatpush.bf16.msra.mxu0 0
    %1176 = vmatpush.bf16.msra.mxu0 0
    %1177 = vmatpush.bf16.msra.mxu0 0
    %1178 = vmatpush.bf16.msra.mxu0 %v1166
    %1179 = vmatpush.bf16.msra.mxu0 %v1165
    %1180 = vmatmul.bf16.gmra.mxu0 %v1170
    %v1181 = vpop.f32.mrf.mxu0
    %v1182 = vadd.f32 %v1156, %v1181
    %v1183 = vpop.f32.mrf.mxu0
    %1184 = vdwg.mxu0
    %v1185 = vtanh.pop %v1182
    %v1186 = vpack.c.bf16 %v1185, %v1185
    %v1187 = vld [vmem:[%s5 + $0x13] sm:$0x1]
    %v1188 = vperm.slane %v1187, 0
    %v1193 = vunpack.c.l.b16 %v1150
    %v1194 = vunpack.c.l.b16 %v1151
    %v1195 = vunpack.c.l.b16 %v1152
    %v1196 = vunpack.c.l.b16 %v1153
    %v1197 = vpack.c.b16 %v1194, %v1193
    %v1198 = vpack.c.b16 %v1196, %v1195
    %v1202 = vsel %vm165, %v1186, 0
    %1204 = vmatpush.bf16.msra.mxu0 0
    %1205 = vmatpush.bf16.msra.mxu0 0
    %1206 = vmatpush.bf16.msra.mxu0 0
    %1207 = vmatpush.bf16.msra.mxu0 0
    %1208 = vmatpush.bf16.msra.mxu0 0
    %1209 = vmatpush.bf16.msra.mxu0 0
    %1210 = vmatpush.bf16.msra.mxu0 %v1198
    %1211 = vmatpush.bf16.msra.mxu0 %v1197
    %1212 = vmatmul.bf16.gmra.mxu0 %v1202
    %v1213 = vpop.f32.mrf.mxu0
    %v1214 = vadd.f32 %v1188, %v1213
    %v1215 = vpop.f32.mrf.mxu0
    %1216 = vdwg.mxu0
    %vm1217 = vcmask 25600
    %1218 = vst.msk [vmem:[#allocation8] sm:$0x3] %vm1217, %v1214
    // Predicated region
    $region26: #{dark_pattern_classifier.1} parent=1 // pred_check
      _
    $region27: #{dark_pattern_classifier.1} parent=1 // pred_check_branch
      %1220 = sbr.rel (0) target = $region29
    $region28: #{dark_pattern_classifier.1} parent=1 // pred_region
      %1222 = vsyncadd [#allocation7], 0
      %s1224 = sshll.u32 [#allocation8], 4
      %s1225 = int_to_ptr.vmem [resolvable:$true] %s1224
      %s1226 = sshll.u32 %s6, 4
      %s1227 = int_to_ptr.hbm [resolvable:$true] %s1226
      %1229 = dma.vmem_to_hbm [thread:$0]  %s1225, 32, %s1227, [#allocation7]
    $region29: #{dark_pattern_classifier.1} parent=1 // pred_fallthru
      _
    // Predicated region
    $region30: #{dark_pattern_classifier.1} parent=1 // pred_check
      _
    $region31: #{dark_pattern_classifier.1} parent=1 // pred_check_branch
      %1231 = sbr.rel (0) target = $region33
    $region32: #{dark_pattern_classifier.1} parent=1 // pred_region
      %1233 = dma.done [#allocation7], 32
    $region33: #{dark_pattern_classifier.1} parent=1 // pred_fallthru
      _
    %1234 = vsyncpa [#allocation6], 1
    %1235 = vsyncpa [#allocation7], 1

</llo_original>
